<compile_context>
chip_gen: v7x
topology: tpu7x:2x2x1
jax: 0.10.0
libtpu: 0.0.40
codegen_flags: <defaults>
</compile_context>

<pallas_src>
import functools

import jax
import jax.numpy as jnp
from jax import lax
from jax.experimental import pallas as pl
from jax.experimental.pallas import tpu as pltpu


def _round_up(x, m):
    return (x + m - 1) // m * m


def _encoder_lstm_kernel(emb_ref, w_ih_ref, w_hh_ref, b_ref,
                         hn_ref, cn_ref,
                         hseq_ref, gates_ref, *, seq_len, b_pad, feat_pad):
    """One grid step == one LSTM layer over the full (padded) sequence.

    emb_ref:   (S, B_pad, P)      padded embedded inputs (read on layer 0 only)
    w_ih_ref:  (1, P, 4P)         input->hidden weights, gate-major 128 slabs
    w_hh_ref:  (1, P, 4P)         hidden->hidden weights, gate-major 128 slabs
    b_ref:     (1, 1, 4P)         combined bias (b_ih + b_hh), gate-major slabs
    hn_ref:    (1, B_pad, P)      final hidden state of this layer
    cn_ref:    (1, B_pad, P)      final cell state of this layer
    hseq_ref:  (S, B_pad, P)      VMEM scratch: layer input / layer output
    gates_ref: (S, B_pad, 4P)     VMEM scratch: precomputed input projection
    """
    S, B, P = seq_len, b_pad, feat_pad
    layer = pl.program_id(0)

    # Layer 0 consumes the embeddings; deeper layers consume the previous
    # layer's hidden sequence, which is already sitting in hseq_ref.
    @pl.when(layer == 0)
    def _():
        hseq_ref[...] = emb_ref[...]

    w_ih = w_ih_ref[0]                                   # (P, 4P)
    w_hh = w_hh_ref[0]                                   # (P, 4P)
    b = b_ref[0]                                         # (1, 4P)

    # ---- Hoisted input projection: one big MXU matmul for all timesteps ----
    x2d = hseq_ref[...].reshape(S * B, P)
    gates_x = jnp.dot(x2d, w_ih, preferred_element_type=jnp.float32) + b
    gates_ref[...] = gates_x.reshape(S, B, 4 * P)

    # ---- Serial recurrence: only h @ W_hh + gate math on the critical path --
    def step(t, carry):
        h, c = carry
        gates = gates_ref[t] + jnp.dot(h, w_hh,
                                       preferred_element_type=jnp.float32)
        # 128-aligned gate slabs -> cheap vreg slices. sigmoid/tanh go to EUP.
        i = jax.nn.sigmoid(gates[:, 0 * P:1 * P])
        f = jax.nn.sigmoid(gates[:, 1 * P:2 * P])
        g = jnp.tanh(gates[:, 2 * P:3 * P])
        o = jax.nn.sigmoid(gates[:, 3 * P:4 * P])
        c_new = f * c + i * g
        h_new = o * jnp.tanh(c_new)
        hseq_ref[t] = h_new                              # lane-dense (8,128) store
        return h_new, c_new

    h0 = jnp.zeros((B, P), jnp.float32)
    c0 = jnp.zeros((B, P), jnp.float32)
    h_fin, c_fin = lax.fori_loop(0, S, step, (h0, c0), unroll=True)

    hn_ref[0] = h_fin
    cn_ref[0] = c_fin


def encoder_forward(embedding, packed, x_tokens, *, hid_dim):
    """embedding: (V, E); packed: padded stacked layer params;
    x_tokens: (S, B) int32 -> (hn, cn), each (num_layers, B, hid_dim)."""
    S, B = x_tokens.shape
    E = embedding.shape[1]
    L, P, _ = packed["w_ih"].shape
    B_pad = _round_up(max(B, 8), 8)

    # dropout = nn.Identity() -> no-op.  Embedding lookup stays in plain JAX.
    emb = jnp.take(embedding, x_tokens, axis=0)                  # (S, B, E)
    emb_p = jnp.zeros((S, B_pad, P), jnp.float32).at[:, :B, :E].set(emb)

    kern = functools.partial(_encoder_lstm_kernel,
                             seq_len=S, b_pad=B_pad, feat_pad=P)
    hn, cn = pl.pallas_call(
        kern,
        out_shape=(jax.ShapeDtypeStruct((L, B_pad, P), jnp.float32),
                   jax.ShapeDtypeStruct((L, B_pad, P), jnp.float32)),
        grid_spec=pltpu.PrefetchScalarGridSpec(
            num_scalar_prefetch=0,
            grid=(L,),
            in_specs=[
                pl.BlockSpec((S, B_pad, P), lambda l: (0, 0, 0)),
                pl.BlockSpec((1, P, 4 * P), lambda l: (l, 0, 0)),
                pl.BlockSpec((1, P, 4 * P), lambda l: (l, 0, 0)),
                pl.BlockSpec((1, 1, 4 * P), lambda l: (l, 0, 0)),
            ],
            out_specs=(
                pl.BlockSpec((1, B_pad, P), lambda l: (l, 0, 0)),
                pl.BlockSpec((1, B_pad, P), lambda l: (l, 0, 0)),
            ),
            scratch_shapes=[
                pltpu.VMEM((S, B_pad, P), jnp.float32),       # hseq carry
                pltpu.VMEM((S, B_pad, 4 * P), jnp.float32),   # gates_x
            ]),
        compiler_params=pltpu.CompilerParams(
            dimension_semantics=("arbitrary",)),              # layers are sequential
    )(emb_p, packed["w_ih"], packed["w_hh"], packed["b"])

    return hn[:, :B, :hid_dim], cn[:, :B, :hid_dim]


# ----------------------------------------------------------------------------
# Parameter construction (PyTorch-layout raw params + padded/packed form).
# ----------------------------------------------------------------------------
def init_raw_params(key, vocab_size, emb_dim, hid_dim, num_layers):
    ks = jax.random.split(key, 1 + 4 * num_layers)
    params = {
        "embedding": jax.random.normal(ks[0], (vocab_size, emb_dim),
                                       jnp.float32),
        "hid_dim": hid_dim,
        "layers": [],
    }
    bound = float(1.0 / (hid_dim ** 0.5))
    for l in range(num_layers):
        in_dim = emb_dim if l == 0 else hid_dim
        k1, k2, k3, k4 = ks[1 + 4 * l: 1 + 4 * (l + 1)]
        params["layers"].append({
            "w_ih": jax.random.uniform(k1, (4 * hid_dim, in_dim), jnp.float32,
                                       -bound, bound),
            "w_hh": jax.random.uniform(k2, (4 * hid_dim, hid_dim), jnp.float32,
                                       -bound, bound),
            "b_ih": jax.random.uniform(k3, (4 * hid_dim,), jnp.float32,
                                       -bound, bound),
            "b_hh": jax.random.uniform(k4, (4 * hid_dim,), jnp.float32,
                                       -bound, bound),
        })
    return params


def prepare_params(raw, pad):
    """Pad weights to (P, 4P) with each gate in its own 128-aligned slab."""
    H = raw["hid_dim"]
    w_ih_all, w_hh_all, b_all = [], [], []
    for lay in raw["layers"]:
        w_ih, w_hh = lay["w_ih"], lay["w_hh"]
        in_dim = w_ih.shape[1]

        wi = jnp.zeros((pad, 4, pad), jnp.float32)
        wi = wi.at[:in_dim, :, :H].set(
            jnp.transpose(w_ih.reshape(4, H, in_dim), (2, 0, 1)))
        w_ih_all.append(wi.reshape(pad, 4 * pad))

        wh = jnp.zeros((pad, 4, pad), jnp.float32)
        wh = wh.at[:H, :, :H].set(
            jnp.transpose(w_hh.reshape(4, H, H), (2, 0, 1)))
        w_hh_all.append(wh.reshape(pad, 4 * pad))

        bb = jnp.zeros((4, pad), jnp.float32)
        bb = bb.at[:, :H].set((lay["b_ih"] + lay["b_hh"]).reshape(4, H))
        b_all.append(bb.reshape(1, 4 * pad))

    return {"w_ih": jnp.stack(w_ih_all),
            "w_hh": jnp.stack(w_hh_all),
            "b": jnp.stack(b_all)}


# ----------------------------------------------------------------------------
# Pure-JAX reference (PyTorch nn.LSTM semantics) for correctness checking.
# ----------------------------------------------------------------------------
def encoder_reference(raw, x_tokens):
    emb = jnp.take(raw["embedding"], x_tokens, axis=0)       # (S, B, E)
    B = x_tokens.shape[1]
    H = raw["hid_dim"]
    hi = lax.Precision.HIGHEST
    inp = emb
    hns, cns = [], []
    for lay in raw["layers"]:
        w_ih, w_hh = lay["w_ih"], lay["w_hh"]
        b = lay["b_ih"] + lay["b_hh"]

        def step(carry, x_t, w_ih=w_ih, w_hh=w_hh, b=b):
            h, c = carry
            gates = (jnp.dot(x_t, w_ih.T, precision=hi)
                     + jnp.dot(h, w_hh.T, precision=hi) + b)
            i, f, g, o = jnp.split(gates, 4, axis=-1)
            c_new = jax.nn.sigmoid(f) * c + jax.nn.sigmoid(i) * jnp.tanh(g)
            h_new = jax.nn.sigmoid(o) * jnp.tanh(c_new)
            return (h_new, c_new), h_new

        (hn, cn), hseq = lax.scan(
            step, (jnp.zeros((B, H), jnp.float32),
                   jnp.zeros((B, H), jnp.float32)), inp)
        inp = hseq
        hns.append(hn)
        cns.append(cn)
    return jnp.stack(hns), jnp.stack(cns)


if __name__ == "__main__":
    vocab_size, emb_dim, hid_dim, num_layers = 50, 16, 32, 2
    seq_len, batch = 8, 2

    key = jax.random.PRNGKey(0)
    k_params, k_tok = jax.random.split(key)
    raw = init_raw_params(k_params, vocab_size, emb_dim, hid_dim, num_layers)
    x = jax.random.randint(k_tok, (seq_len, batch), 0, vocab_size, jnp.int32)

    pad = _round_up(max(emb_dim, hid_dim), 128)
    packed = prepare_params(raw, pad)

    fwd = jax.jit(functools.partial(encoder_forward, hid_dim=hid_dim))
    hn, cn = fwd(raw["embedding"], packed, x)
    jax.block_until_ready((hn, cn))

    assert hn.shape == (num_layers, batch, hid_dim)
    assert cn.shape == (num_layers, batch, hid_dim)
    assert hn.dtype == jnp.float32 and cn.dtype == jnp.float32

    hn_ref, cn_ref = encoder_reference(raw, x)
    assert jnp.allclose(hn, hn_ref, atol=1e-3, rtol=1e-3)
    assert jnp.allclose(cn, cn_ref, atol=1e-3, rtol=1e-3)

    print("KERNEL_OK")
</pallas_src>

<mosaic_0001>
module attributes {stable_mosaic.version = 11 : i64} {
  func.func @_encoder_lstm_kernel(%arg0: i32, %arg1: memref<8x8x128xf32, #tpu.memory_space<vmem>>, %arg2: memref<1x128x512xf32, #tpu.memory_space<vmem>>, %arg3: memref<1x128x512xf32, #tpu.memory_space<vmem>>, %arg4: memref<1x1x512xf32, #tpu.memory_space<vmem>>, %arg5: memref<1x8x128xf32, #tpu.memory_space<vmem>>, %arg6: memref<1x8x128xf32, #tpu.memory_space<vmem>>, %arg7: memref<8x8x128xf32, #tpu.memory_space<vmem>>, %arg8: memref<8x8x512xf32, #tpu.memory_space<vmem>>) attributes {dimension_semantics = [#tpu.dimension_semantics<arbitrary>], iteration_bounds = array<i64: 2>, scalar_prefetch = 0 : i64, scratch_operands = 2 : i64, tpu.core_type = #tpu.core_type<tc>, window_params = [{pipeline_mode = #tpu.pipeline_mode<synchronous>, transform_indices = @transform_0, window_bounds = array<i64: 8, 8, 128>}, {transform_indices = @transform_1, window_bounds = array<i64: 1, 128, 512>}, {transform_indices = @transform_2, window_bounds = array<i64: 1, 128, 512>}, {transform_indices = @transform_3, window_bounds = array<i64: 1, 1, 512>}, {transform_indices = @transform_4, window_bounds = array<i64: 1, 8, 128>}, {transform_indices = @transform_5, window_bounds = array<i64: 1, 8, 128>}]} {
    %c0_i32 = arith.constant 0 : i32
    %0 = arith.cmpi eq, %arg0, %c0_i32 : i32
    %1 = arith.extui %0 : i1 to i32
    %c0_i32_0 = arith.constant 0 : i32
    %2 = arith.cmpi ne, %1, %c0_i32_0 : i32
    scf.if %2 {
      %c0_88 = arith.constant 0 : index
      %c0_89 = arith.constant 0 : index
      %c0_90 = arith.constant 0 : index
      %296 = vector.load %arg1[%c0_88, %c0_89, %c0_90] : memref<8x8x128xf32, #tpu.memory_space<vmem>>, vector<8x8x128xf32>
      %c0_91 = arith.constant 0 : index
      %c0_92 = arith.constant 0 : index
      %c0_93 = arith.constant 0 : index
      %297 = vector.load %arg7[%c0_91, %c0_92, %c0_93] : memref<8x8x128xf32, #tpu.memory_space<vmem>>, vector<8x8x128xf32>
      tpu.vector_store %arg7[%c0_91, %c0_92, %c0_93], %296 {strides = array<i32>} : memref<8x8x128xf32, #tpu.memory_space<vmem>>, vector<8x8x128xf32>,
    } else {
    }
    %c0 = arith.constant 0 : index
    %c0_1 = arith.constant 0 : index
    %c0_2 = arith.constant 0 : index
    %3 = vector.load %arg2[%c0, %c0_1, %c0_2] : memref<1x128x512xf32, #tpu.memory_space<vmem>>, vector<1x128x512xf32>
    %4 = vector.shape_cast %3 : vector<1x128x512xf32> to vector<128x512xf32>
    %c0_3 = arith.constant 0 : index
    %c0_4 = arith.constant 0 : index
    %c0_5 = arith.constant 0 : index
    %5 = vector.load %arg3[%c0_3, %c0_4, %c0_5] : memref<1x128x512xf32, #tpu.memory_space<vmem>>, vector<1x128x512xf32>
    %6 = vector.shape_cast %5 : vector<1x128x512xf32> to vector<128x512xf32>
    %c0_6 = arith.constant 0 : index
    %c0_7 = arith.constant 0 : index
    %c0_8 = arith.constant 0 : index
    %7 = vector.load %arg4[%c0_6, %c0_7, %c0_8] : memref<1x1x512xf32, #tpu.memory_space<vmem>>, vector<1x1x512xf32>
    %8 = vector.shape_cast %7 : vector<1x1x512xf32> to vector<1x512xf32>
    %c0_9 = arith.constant 0 : index
    %c0_10 = arith.constant 0 : index
    %c0_11 = arith.constant 0 : index
    %9 = vector.load %arg7[%c0_9, %c0_10, %c0_11] : memref<8x8x128xf32, #tpu.memory_space<vmem>>, vector<8x8x128xf32>
    %10 = vector.shape_cast %9 : vector<8x8x128xf32> to vector<64x128xf32>
    %cst = arith.constant dense<0.000000e+00> : vector<64x512xf32>
    %11 = tpu.matmul %10, %4, %cst {dimension_numbers = #tpu.dot_dimension_numbers<[1], [0], [0], [1], [0, 0, 1, 1], [], []>} : vector<64x128xf32>, vector<128x512xf32>, vector<64x512xf32> -> vector<64x512xf32>
    %12 = vector.broadcast %8 : vector<1x512xf32> to vector<64x512xf32>
    %13 = arith.addf %11, %12 : vector<64x512xf32>
    %14 = vector.shape_cast %13 : vector<64x512xf32> to vector<8x8x512xf32>
    %c0_12 = arith.constant 0 : index
    %c0_13 = arith.constant 0 : index
    %c0_14 = arith.constant 0 : index
    %15 = vector.load %arg8[%c0_12, %c0_13, %c0_14] : memref<8x8x512xf32, #tpu.memory_space<vmem>>, vector<8x8x512xf32>
    tpu.vector_store %arg8[%c0_12, %c0_13, %c0_14], %14 {strides = array<i32>} : memref<8x8x512xf32, #tpu.memory_space<vmem>>, vector<8x8x512xf32>,
    %cst_15 = arith.constant 0.000000e+00 : f32
    %16 = vector.broadcast %cst_15 : f32 to vector<8x128xf32>
    %cst_16 = arith.constant 0.000000e+00 : f32
    %17 = vector.broadcast %cst_16 : f32 to vector<8x128xf32>
    %c0_i32_17 = arith.constant 0 : i32
    %18 = arith.index_cast %c0_i32_17 : i32 to index
    %c0_18 = arith.constant 0 : index
    %c0_19 = arith.constant 0 : index
    %19 = vector.load %arg8[%18, %c0_18, %c0_19] : memref<8x8x512xf32, #tpu.memory_space<vmem>>, vector<1x8x512xf32>
    %20 = vector.shape_cast %19 : vector<1x8x512xf32> to vector<8x512xf32>
    %cst_20 = arith.constant dense<0.000000e+00> : vector<8x512xf32>
    %21 = tpu.matmul %16, %6, %cst_20 {dimension_numbers = #tpu.dot_dimension_numbers<[1], [0], [0], [1], [0, 0, 1, 1], [], []>} : vector<8x128xf32>, vector<128x512xf32>, vector<8x512xf32> -> vector<8x512xf32>
    %22 = arith.addf %20, %21 : vector<8x512xf32>
    %23 = vector.extract_strided_slice %22 {offsets = [0, 0], sizes = [8, 128], strides = [1, 1]} : vector<8x512xf32> to vector<8x128xf32>
    %24 = arith.negf %23 : vector<8x128xf32>
    %25 = math.exp %24 : vector<8x128xf32>
    %cst_21 = arith.constant 1.000000e+00 : f32
    %26 = vector.broadcast %cst_21 : f32 to vector<8x128xf32>
    %27 = arith.addf %26, %25 : vector<8x128xf32>
    %28 = arith.divf %26, %27 : vector<8x128xf32>
    %29 = vector.extract_strided_slice %22 {offsets = [0, 128], sizes = [8, 128], strides = [1, 1]} : vector<8x512xf32> to vector<8x128xf32>
    %30 = arith.negf %29 : vector<8x128xf32>
    %31 = math.exp %30 : vector<8x128xf32>
    %cst_22 = arith.constant 1.000000e+00 : f32
    %32 = vector.broadcast %cst_22 : f32 to vector<8x128xf32>
    %33 = arith.addf %32, %31 : vector<8x128xf32>
    %34 = arith.divf %32, %33 : vector<8x128xf32>
    %35 = vector.extract_strided_slice %22 {offsets = [0, 256], sizes = [8, 128], strides = [1, 1]} : vector<8x512xf32> to vector<8x128xf32>
    %36 = math.tanh %35 : vector<8x128xf32>
    %37 = vector.extract_strided_slice %22 {offsets = [0, 384], sizes = [8, 128], strides = [1, 1]} : vector<8x512xf32> to vector<8x128xf32>
    %38 = arith.negf %37 : vector<8x128xf32>
    %39 = math.exp %38 : vector<8x128xf32>
    %cst_23 = arith.constant 1.000000e+00 : f32
    %40 = vector.broadcast %cst_23 : f32 to vector<8x128xf32>
    %41 = arith.addf %40, %39 : vector<8x128xf32>
    %42 = arith.divf %40, %41 : vector<8x128xf32>
    %43 = arith.mulf %34, %17 : vector<8x128xf32>
    %44 = arith.mulf %28, %36 : vector<8x128xf32>
    %45 = arith.addf %43, %44 : vector<8x128xf32>
    %46 = math.tanh %45 : vector<8x128xf32>
    %47 = arith.mulf %42, %46 : vector<8x128xf32>
    %48 = arith.index_cast %c0_i32_17 : i32 to index
    %c0_24 = arith.constant 0 : index
    %c0_25 = arith.constant 0 : index
    %49 = vector.load %arg7[%48, %c0_24, %c0_25] : memref<8x8x128xf32, #tpu.memory_space<vmem>>, vector<1x8x128xf32>
    %50 = vector.shape_cast %49 : vector<1x8x128xf32> to vector<8x128xf32>
    %51 = vector.shape_cast %47 : vector<8x128xf32> to vector<1x8x128xf32>
    tpu.vector_store %arg7[%48, %c0_24, %c0_25], %51 {strides = array<i32>} : memref<8x8x128xf32, #tpu.memory_space<vmem>>, vector<1x8x128xf32>,
    %c1_i32 = arith.constant 1 : i32
    %52 = arith.index_cast %c1_i32 : i32 to index
    %c0_26 = arith.constant 0 : index
    %c0_27 = arith.constant 0 : index
    %53 = vector.load %arg8[%52, %c0_26, %c0_27] : memref<8x8x512xf32, #tpu.memory_space<vmem>>, vector<1x8x512xf32>
    %54 = vector.shape_cast %53 : vector<1x8x512xf32> to vector<8x512xf32>
    %cst_28 = arith.constant dense<0.000000e+00> : vector<8x512xf32>
    %55 = tpu.matmul %47, %6, %cst_28 {dimension_numbers = #tpu.dot_dimension_numbers<[1], [0], [0], [1], [0, 0, 1, 1], [], []>} : vector<8x128xf32>, vector<128x512xf32>, vector<8x512xf32> -> vector<8x512xf32>
    %56 = arith.addf %54, %55 : vector<8x512xf32>
    %57 = vector.extract_strided_slice %56 {offsets = [0, 0], sizes = [8, 128], strides = [1, 1]} : vector<8x512xf32> to vector<8x128xf32>
    %58 = arith.negf %57 : vector<8x128xf32>
    %59 = math.exp %58 : vector<8x128xf32>
    %cst_29 = arith.constant 1.000000e+00 : f32
    %60 = vector.broadcast %cst_29 : f32 to vector<8x128xf32>
    %61 = arith.addf %60, %59 : vector<8x128xf32>
    %62 = arith.divf %60, %61 : vector<8x128xf32>
    %63 = vector.extract_strided_slice %56 {offsets = [0, 128], sizes = [8, 128], strides = [1, 1]} : vector<8x512xf32> to vector<8x128xf32>
    %64 = arith.negf %63 : vector<8x128xf32>
    %65 = math.exp %64 : vector<8x128xf32>
    %cst_30 = arith.constant 1.000000e+00 : f32
    %66 = vector.broadcast %cst_30 : f32 to vector<8x128xf32>
    %67 = arith.addf %66, %65 : vector<8x128xf32>
    %68 = arith.divf %66, %67 : vector<8x128xf32>
    %69 = vector.extract_strided_slice %56 {offsets = [0, 256], sizes = [8, 128], strides = [1, 1]} : vector<8x512xf32> to vector<8x128xf32>
    %70 = math.tanh %69 : vector<8x128xf32>
    %71 = vector.extract_strided_slice %56 {offsets = [0, 384], sizes = [8, 128], strides = [1, 1]} : vector<8x512xf32> to vector<8x128xf32>
    %72 = arith.negf %71 : vector<8x128xf32>
    %73 = math.exp %72 : vector<8x128xf32>
    %cst_31 = arith.constant 1.000000e+00 : f32
    %74 = vector.broadcast %cst_31 : f32 to vector<8x128xf32>
    %75 = arith.addf %74, %73 : vector<8x128xf32>
    %76 = arith.divf %74, %75 : vector<8x128xf32>
    %77 = arith.mulf %68, %45 : vector<8x128xf32>
    %78 = arith.mulf %62, %70 : vector<8x128xf32>
    %79 = arith.addf %77, %78 : vector<8x128xf32>
    %80 = math.tanh %79 : vector<8x128xf32>
    %81 = arith.mulf %76, %80 : vector<8x128xf32>
    %82 = arith.index_cast %c1_i32 : i32 to index
    %c0_32 = arith.constant 0 : index
    %c0_33 = arith.constant 0 : index
    %83 = vector.load %arg7[%82, %c0_32, %c0_33] : memref<8x8x128xf32, #tpu.memory_space<vmem>>, vector<1x8x128xf32>
    %84 = vector.shape_cast %83 : vector<1x8x128xf32> to vector<8x128xf32>
    %85 = vector.shape_cast %81 : vector<8x128xf32> to vector<1x8x128xf32>
    tpu.vector_store %arg7[%82, %c0_32, %c0_33], %85 {strides = array<i32>} : memref<8x8x128xf32, #tpu.memory_space<vmem>>, vector<1x8x128xf32>,
    %c2_i32 = arith.constant 2 : i32
    %86 = arith.index_cast %c2_i32 : i32 to index
    %c0_34 = arith.constant 0 : index
    %c0_35 = arith.constant 0 : index
    %87 = vector.load %arg8[%86, %c0_34, %c0_35] : memref<8x8x512xf32, #tpu.memory_space<vmem>>, vector<1x8x512xf32>
    %88 = vector.shape_cast %87 : vector<1x8x512xf32> to vector<8x512xf32>
    %cst_36 = arith.constant dense<0.000000e+00> : vector<8x512xf32>
    %89 = tpu.matmul %81, %6, %cst_36 {dimension_numbers = #tpu.dot_dimension_numbers<[1], [0], [0], [1], [0, 0, 1, 1], [], []>} : vector<8x128xf32>, vector<128x512xf32>, vector<8x512xf32> -> vector<8x512xf32>
    %90 = arith.addf %88, %89 : vector<8x512xf32>
    %91 = vector.extract_strided_slice %90 {offsets = [0, 0], sizes = [8, 128], strides = [1, 1]} : vector<8x512xf32> to vector<8x128xf32>
    %92 = arith.negf %91 : vector<8x128xf32>
    %93 = math.exp %92 : vector<8x128xf32>
    %cst_37 = arith.constant 1.000000e+00 : f32
    %94 = vector.broadcast %cst_37 : f32 to vector<8x128xf32>
    %95 = arith.addf %94, %93 : vector<8x128xf32>
    %96 = arith.divf %94, %95 : vector<8x128xf32>
    %97 = vector.extract_strided_slice %90 {offsets = [0, 128], sizes = [8, 128], strides = [1, 1]} : vector<8x512xf32> to vector<8x128xf32>
    %98 = arith.negf %97 : vector<8x128xf32>
    %99 = math.exp %98 : vector<8x128xf32>
    %cst_38 = arith.constant 1.000000e+00 : f32
    %100 = vector.broadcast %cst_38 : f32 to vector<8x128xf32>
    %101 = arith.addf %100, %99 : vector<8x128xf32>
    %102 = arith.divf %100, %101 : vector<8x128xf32>
    %103 = vector.extract_strided_slice %90 {offsets = [0, 256], sizes = [8, 128], strides = [1, 1]} : vector<8x512xf32> to vector<8x128xf32>
    %104 = math.tanh %103 : vector<8x128xf32>
    %105 = vector.extract_strided_slice %90 {offsets = [0, 384], sizes = [8, 128], strides = [1, 1]} : vector<8x512xf32> to vector<8x128xf32>
    %106 = arith.negf %105 : vector<8x128xf32>
    %107 = math.exp %106 : vector<8x128xf32>
    %cst_39 = arith.constant 1.000000e+00 : f32
    %108 = vector.broadcast %cst_39 : f32 to vector<8x128xf32>
    %109 = arith.addf %108, %107 : vector<8x128xf32>
    %110 = arith.divf %108, %109 : vector<8x128xf32>
    %111 = arith.mulf %102, %79 : vector<8x128xf32>
    %112 = arith.mulf %96, %104 : vector<8x128xf32>
    %113 = arith.addf %111, %112 : vector<8x128xf32>
    %114 = math.tanh %113 : vector<8x128xf32>
    %115 = arith.mulf %110, %114 : vector<8x128xf32>
    %116 = arith.index_cast %c2_i32 : i32 to index
    %c0_40 = arith.constant 0 : index
    %c0_41 = arith.constant 0 : index
    %117 = vector.load %arg7[%116, %c0_40, %c0_41] : memref<8x8x128xf32, #tpu.memory_space<vmem>>, vector<1x8x128xf32>
    %118 = vector.shape_cast %117 : vector<1x8x128xf32> to vector<8x128xf32>
    %119 = vector.shape_cast %115 : vector<8x128xf32> to vector<1x8x128xf32>
    tpu.vector_store %arg7[%116, %c0_40, %c0_41], %119 {strides = array<i32>} : memref<8x8x128xf32, #tpu.memory_space<vmem>>, vector<1x8x128xf32>,
    %c3_i32 = arith.constant 3 : i32
    %120 = arith.index_cast %c3_i32 : i32 to index
    %c0_42 = arith.constant 0 : index
    %c0_43 = arith.constant 0 : index
    %121 = vector.load %arg8[%120, %c0_42, %c0_43] : memref<8x8x512xf32, #tpu.memory_space<vmem>>, vector<1x8x512xf32>
    %122 = vector.shape_cast %121 : vector<1x8x512xf32> to vector<8x512xf32>
    %cst_44 = arith.constant dense<0.000000e+00> : vector<8x512xf32>
    %123 = tpu.matmul %115, %6, %cst_44 {dimension_numbers = #tpu.dot_dimension_numbers<[1], [0], [0], [1], [0, 0, 1, 1], [], []>} : vector<8x128xf32>, vector<128x512xf32>, vector<8x512xf32> -> vector<8x512xf32>
    %124 = arith.addf %122, %123 : vector<8x512xf32>
    %125 = vector.extract_strided_slice %124 {offsets = [0, 0], sizes = [8, 128], strides = [1, 1]} : vector<8x512xf32> to vector<8x128xf32>
    %126 = arith.negf %125 : vector<8x128xf32>
    %127 = math.exp %126 : vector<8x128xf32>
    %cst_45 = arith.constant 1.000000e+00 : f32
    %128 = vector.broadcast %cst_45 : f32 to vector<8x128xf32>
    %129 = arith.addf %128, %127 : vector<8x128xf32>
    %130 = arith.divf %128, %129 : vector<8x128xf32>
    %131 = vector.extract_strided_slice %124 {offsets = [0, 128], sizes = [8, 128], strides = [1, 1]} : vector<8x512xf32> to vector<8x128xf32>
    %132 = arith.negf %131 : vector<8x128xf32>
    %133 = math.exp %132 : vector<8x128xf32>
    %cst_46 = arith.constant 1.000000e+00 : f32
    %134 = vector.broadcast %cst_46 : f32 to vector<8x128xf32>
    %135 = arith.addf %134, %133 : vector<8x128xf32>
    %136 = arith.divf %134, %135 : vector<8x128xf32>
    %137 = vector.extract_strided_slice %124 {offsets = [0, 256], sizes = [8, 128], strides = [1, 1]} : vector<8x512xf32> to vector<8x128xf32>
    %138 = math.tanh %137 : vector<8x128xf32>
    %139 = vector.extract_strided_slice %124 {offsets = [0, 384], sizes = [8, 128], strides = [1, 1]} : vector<8x512xf32> to vector<8x128xf32>
    %140 = arith.negf %139 : vector<8x128xf32>
    %141 = math.exp %140 : vector<8x128xf32>
    %cst_47 = arith.constant 1.000000e+00 : f32
    %142 = vector.broadcast %cst_47 : f32 to vector<8x128xf32>
    %143 = arith.addf %142, %141 : vector<8x128xf32>
    %144 = arith.divf %142, %143 : vector<8x128xf32>
    %145 = arith.mulf %136, %113 : vector<8x128xf32>
    %146 = arith.mulf %130, %138 : vector<8x128xf32>
    %147 = arith.addf %145, %146 : vector<8x128xf32>
    %148 = math.tanh %147 : vector<8x128xf32>
    %149 = arith.mulf %144, %148 : vector<8x128xf32>
    %150 = arith.index_cast %c3_i32 : i32 to index
    %c0_48 = arith.constant 0 : index
    %c0_49 = arith.constant 0 : index
    %151 = vector.load %arg7[%150, %c0_48, %c0_49] : memref<8x8x128xf32, #tpu.memory_space<vmem>>, vector<1x8x128xf32>
    %152 = vector.shape_cast %151 : vector<1x8x128xf32> to vector<8x128xf32>
    %153 = vector.shape_cast %149 : vector<8x128xf32> to vector<1x8x128xf32>
    tpu.vector_store %arg7[%150, %c0_48, %c0_49], %153 {strides = array<i32>} : memref<8x8x128xf32, #tpu.memory_space<vmem>>, vector<1x8x128xf32>,
    %c4_i32 = arith.constant 4 : i32
    %154 = arith.index_cast %c4_i32 : i32 to index
    %c0_50 = arith.constant 0 : index
    %c0_51 = arith.constant 0 : index
    %155 = vector.load %arg8[%154, %c0_50, %c0_51] : memref<8x8x512xf32, #tpu.memory_space<vmem>>, vector<1x8x512xf32>
    %156 = vector.shape_cast %155 : vector<1x8x512xf32> to vector<8x512xf32>
    %cst_52 = arith.constant dense<0.000000e+00> : vector<8x512xf32>
    %157 = tpu.matmul %149, %6, %cst_52 {dimension_numbers = #tpu.dot_dimension_numbers<[1], [0], [0], [1], [0, 0, 1, 1], [], []>} : vector<8x128xf32>, vector<128x512xf32>, vector<8x512xf32> -> vector<8x512xf32>
    %158 = arith.addf %156, %157 : vector<8x512xf32>
    %159 = vector.extract_strided_slice %158 {offsets = [0, 0], sizes = [8, 128], strides = [1, 1]} : vector<8x512xf32> to vector<8x128xf32>
    %160 = arith.negf %159 : vector<8x128xf32>
    %161 = math.exp %160 : vector<8x128xf32>
    %cst_53 = arith.constant 1.000000e+00 : f32
    %162 = vector.broadcast %cst_53 : f32 to vector<8x128xf32>
    %163 = arith.addf %162, %161 : vector<8x128xf32>
    %164 = arith.divf %162, %163 : vector<8x128xf32>
    %165 = vector.extract_strided_slice %158 {offsets = [0, 128], sizes = [8, 128], strides = [1, 1]} : vector<8x512xf32> to vector<8x128xf32>
    %166 = arith.negf %165 : vector<8x128xf32>
    %167 = math.exp %166 : vector<8x128xf32>
    %cst_54 = arith.constant 1.000000e+00 : f32
    %168 = vector.broadcast %cst_54 : f32 to vector<8x128xf32>
    %169 = arith.addf %168, %167 : vector<8x128xf32>
    %170 = arith.divf %168, %169 : vector<8x128xf32>
    %171 = vector.extract_strided_slice %158 {offsets = [0, 256], sizes = [8, 128], strides = [1, 1]} : vector<8x512xf32> to vector<8x128xf32>
    %172 = math.tanh %171 : vector<8x128xf32>
    %173 = vector.extract_strided_slice %158 {offsets = [0, 384], sizes = [8, 128], strides = [1, 1]} : vector<8x512xf32> to vector<8x128xf32>
    %174 = arith.negf %173 : vector<8x128xf32>
    %175 = math.exp %174 : vector<8x128xf32>
    %cst_55 = arith.constant 1.000000e+00 : f32
    %176 = vector.broadcast %cst_55 : f32 to vector<8x128xf32>
    %177 = arith.addf %176, %175 : vector<8x128xf32>
    %178 = arith.divf %176, %177 : vector<8x128xf32>
    %179 = arith.mulf %170, %147 : vector<8x128xf32>
    %180 = arith.mulf %164, %172 : vector<8x128xf32>
    %181 = arith.addf %179, %180 : vector<8x128xf32>
    %182 = math.tanh %181 : vector<8x128xf32>
    %183 = arith.mulf %178, %182 : vector<8x128xf32>
    %184 = arith.index_cast %c4_i32 : i32 to index
    %c0_56 = arith.constant 0 : index
    %c0_57 = arith.constant 0 : index
    %185 = vector.load %arg7[%184, %c0_56, %c0_57] : memref<8x8x128xf32, #tpu.memory_space<vmem>>, vector<1x8x128xf32>
    %186 = vector.shape_cast %185 : vector<1x8x128xf32> to vector<8x128xf32>
    %187 = vector.shape_cast %183 : vector<8x128xf32> to vector<1x8x128xf32>
    tpu.vector_store %arg7[%184, %c0_56, %c0_57], %187 {strides = array<i32>} : memref<8x8x128xf32, #tpu.memory_space<vmem>>, vector<1x8x128xf32>,
    %c5_i32 = arith.constant 5 : i32
    %188 = arith.index_cast %c5_i32 : i32 to index
    %c0_58 = arith.constant 0 : index
    %c0_59 = arith.constant 0 : index
    %189 = vector.load %arg8[%188, %c0_58, %c0_59] : memref<8x8x512xf32, #tpu.memory_space<vmem>>, vector<1x8x512xf32>
    %190 = vector.shape_cast %189 : vector<1x8x512xf32> to vector<8x512xf32>
    %cst_60 = arith.constant dense<0.000000e+00> : vector<8x512xf32>
    %191 = tpu.matmul %183, %6, %cst_60 {dimension_numbers = #tpu.dot_dimension_numbers<[1], [0], [0], [1], [0, 0, 1, 1], [], []>} : vector<8x128xf32>, vector<128x512xf32>, vector<8x512xf32> -> vector<8x512xf32>
    %192 = arith.addf %190, %191 : vector<8x512xf32>
    %193 = vector.extract_strided_slice %192 {offsets = [0, 0], sizes = [8, 128], strides = [1, 1]} : vector<8x512xf32> to vector<8x128xf32>
    %194 = arith.negf %193 : vector<8x128xf32>
    %195 = math.exp %194 : vector<8x128xf32>
    %cst_61 = arith.constant 1.000000e+00 : f32
    %196 = vector.broadcast %cst_61 : f32 to vector<8x128xf32>
    %197 = arith.addf %196, %195 : vector<8x128xf32>
    %198 = arith.divf %196, %197 : vector<8x128xf32>
    %199 = vector.extract_strided_slice %192 {offsets = [0, 128], sizes = [8, 128], strides = [1, 1]} : vector<8x512xf32> to vector<8x128xf32>
    %200 = arith.negf %199 : vector<8x128xf32>
    %201 = math.exp %200 : vector<8x128xf32>
    %cst_62 = arith.constant 1.000000e+00 : f32
    %202 = vector.broadcast %cst_62 : f32 to vector<8x128xf32>
    %203 = arith.addf %202, %201 : vector<8x128xf32>
    %204 = arith.divf %202, %203 : vector<8x128xf32>
    %205 = vector.extract_strided_slice %192 {offsets = [0, 256], sizes = [8, 128], strides = [1, 1]} : vector<8x512xf32> to vector<8x128xf32>
    %206 = math.tanh %205 : vector<8x128xf32>
    %207 = vector.extract_strided_slice %192 {offsets = [0, 384], sizes = [8, 128], strides = [1, 1]} : vector<8x512xf32> to vector<8x128xf32>
    %208 = arith.negf %207 : vector<8x128xf32>
    %209 = math.exp %208 : vector<8x128xf32>
    %cst_63 = arith.constant 1.000000e+00 : f32
    %210 = vector.broadcast %cst_63 : f32 to vector<8x128xf32>
    %211 = arith.addf %210, %209 : vector<8x128xf32>
    %212 = arith.divf %210, %211 : vector<8x128xf32>
    %213 = arith.mulf %204, %181 : vector<8x128xf32>
    %214 = arith.mulf %198, %206 : vector<8x128xf32>
    %215 = arith.addf %213, %214 : vector<8x128xf32>
    %216 = math.tanh %215 : vector<8x128xf32>
    %217 = arith.mulf %212, %216 : vector<8x128xf32>
    %218 = arith.index_cast %c5_i32 : i32 to index
    %c0_64 = arith.constant 0 : index
    %c0_65 = arith.constant 0 : index
    %219 = vector.load %arg7[%218, %c0_64, %c0_65] : memref<8x8x128xf32, #tpu.memory_space<vmem>>, vector<1x8x128xf32>
    %220 = vector.shape_cast %219 : vector<1x8x128xf32> to vector<8x128xf32>
    %221 = vector.shape_cast %217 : vector<8x128xf32> to vector<1x8x128xf32>
    tpu.vector_store %arg7[%218, %c0_64, %c0_65], %221 {strides = array<i32>} : memref<8x8x128xf32, #tpu.memory_space<vmem>>, vector<1x8x128xf32>,
    %c6_i32 = arith.constant 6 : i32
    %222 = arith.index_cast %c6_i32 : i32 to index
    %c0_66 = arith.constant 0 : index
    %c0_67 = arith.constant 0 : index
    %223 = vector.load %arg8[%222, %c0_66, %c0_67] : memref<8x8x512xf32, #tpu.memory_space<vmem>>, vector<1x8x512xf32>
    %224 = vector.shape_cast %223 : vector<1x8x512xf32> to vector<8x512xf32>
    %cst_68 = arith.constant dense<0.000000e+00> : vector<8x512xf32>
    %225 = tpu.matmul %217, %6, %cst_68 {dimension_numbers = #tpu.dot_dimension_numbers<[1], [0], [0], [1], [0, 0, 1, 1], [], []>} : vector<8x128xf32>, vector<128x512xf32>, vector<8x512xf32> -> vector<8x512xf32>
    %226 = arith.addf %224, %225 : vector<8x512xf32>
    %227 = vector.extract_strided_slice %226 {offsets = [0, 0], sizes = [8, 128], strides = [1, 1]} : vector<8x512xf32> to vector<8x128xf32>
    %228 = arith.negf %227 : vector<8x128xf32>
    %229 = math.exp %228 : vector<8x128xf32>
    %cst_69 = arith.constant 1.000000e+00 : f32
    %230 = vector.broadcast %cst_69 : f32 to vector<8x128xf32>
    %231 = arith.addf %230, %229 : vector<8x128xf32>
    %232 = arith.divf %230, %231 : vector<8x128xf32>
    %233 = vector.extract_strided_slice %226 {offsets = [0, 128], sizes = [8, 128], strides = [1, 1]} : vector<8x512xf32> to vector<8x128xf32>
    %234 = arith.negf %233 : vector<8x128xf32>
    %235 = math.exp %234 : vector<8x128xf32>
    %cst_70 = arith.constant 1.000000e+00 : f32
    %236 = vector.broadcast %cst_70 : f32 to vector<8x128xf32>
    %237 = arith.addf %236, %235 : vector<8x128xf32>
    %238 = arith.divf %236, %237 : vector<8x128xf32>
    %239 = vector.extract_strided_slice %226 {offsets = [0, 256], sizes = [8, 128], strides = [1, 1]} : vector<8x512xf32> to vector<8x128xf32>
    %240 = math.tanh %239 : vector<8x128xf32>
    %241 = vector.extract_strided_slice %226 {offsets = [0, 384], sizes = [8, 128], strides = [1, 1]} : vector<8x512xf32> to vector<8x128xf32>
    %242 = arith.negf %241 : vector<8x128xf32>
    %243 = math.exp %242 : vector<8x128xf32>
    %cst_71 = arith.constant 1.000000e+00 : f32
    %244 = vector.broadcast %cst_71 : f32 to vector<8x128xf32>
    %245 = arith.addf %244, %243 : vector<8x128xf32>
    %246 = arith.divf %244, %245 : vector<8x128xf32>
    %247 = arith.mulf %238, %215 : vector<8x128xf32>
    %248 = arith.mulf %232, %240 : vector<8x128xf32>
    %249 = arith.addf %247, %248 : vector<8x128xf32>
    %250 = math.tanh %249 : vector<8x128xf32>
    %251 = arith.mulf %246, %250 : vector<8x128xf32>
    %252 = arith.index_cast %c6_i32 : i32 to index
    %c0_72 = arith.constant 0 : index
    %c0_73 = arith.constant 0 : index
    %253 = vector.load %arg7[%252, %c0_72, %c0_73] : memref<8x8x128xf32, #tpu.memory_space<vmem>>, vector<1x8x128xf32>
    %254 = vector.shape_cast %253 : vector<1x8x128xf32> to vector<8x128xf32>
    %255 = vector.shape_cast %251 : vector<8x128xf32> to vector<1x8x128xf32>
    tpu.vector_store %arg7[%252, %c0_72, %c0_73], %255 {strides = array<i32>} : memref<8x8x128xf32, #tpu.memory_space<vmem>>, vector<1x8x128xf32>,
    %c7_i32 = arith.constant 7 : i32
    %256 = arith.index_cast %c7_i32 : i32 to index
    %c0_74 = arith.constant 0 : index
    %c0_75 = arith.constant 0 : index
    %257 = vector.load %arg8[%256, %c0_74, %c0_75] : memref<8x8x512xf32, #tpu.memory_space<vmem>>, vector<1x8x512xf32>
    %258 = vector.shape_cast %257 : vector<1x8x512xf32> to vector<8x512xf32>
    %cst_76 = arith.constant dense<0.000000e+00> : vector<8x512xf32>
    %259 = tpu.matmul %251, %6, %cst_76 {dimension_numbers = #tpu.dot_dimension_numbers<[1], [0], [0], [1], [0, 0, 1, 1], [], []>} : vector<8x128xf32>, vector<128x512xf32>, vector<8x512xf32> -> vector<8x512xf32>
    %260 = arith.addf %258, %259 : vector<8x512xf32>
    %261 = vector.extract_strided_slice %260 {offsets = [0, 0], sizes = [8, 128], strides = [1, 1]} : vector<8x512xf32> to vector<8x128xf32>
    %262 = arith.negf %261 : vector<8x128xf32>
    %263 = math.exp %262 : vector<8x128xf32>
    %cst_77 = arith.constant 1.000000e+00 : f32
    %264 = vector.broadcast %cst_77 : f32 to vector<8x128xf32>
    %265 = arith.addf %264, %263 : vector<8x128xf32>
    %266 = arith.divf %264, %265 : vector<8x128xf32>
    %267 = vector.extract_strided_slice %260 {offsets = [0, 128], sizes = [8, 128], strides = [1, 1]} : vector<8x512xf32> to vector<8x128xf32>
    %268 = arith.negf %267 : vector<8x128xf32>
    %269 = math.exp %268 : vector<8x128xf32>
    %cst_78 = arith.constant 1.000000e+00 : f32
    %270 = vector.broadcast %cst_78 : f32 to vector<8x128xf32>
    %271 = arith.addf %270, %269 : vector<8x128xf32>
    %272 = arith.divf %270, %271 : vector<8x128xf32>
    %273 = vector.extract_strided_slice %260 {offsets = [0, 256], sizes = [8, 128], strides = [1, 1]} : vector<8x512xf32> to vector<8x128xf32>
    %274 = math.tanh %273 : vector<8x128xf32>
    %275 = vector.extract_strided_slice %260 {offsets = [0, 384], sizes = [8, 128], strides = [1, 1]} : vector<8x512xf32> to vector<8x128xf32>
    %276 = arith.negf %275 : vector<8x128xf32>
    %277 = math.exp %276 : vector<8x128xf32>
    %cst_79 = arith.constant 1.000000e+00 : f32
    %278 = vector.broadcast %cst_79 : f32 to vector<8x128xf32>
    %279 = arith.addf %278, %277 : vector<8x128xf32>
    %280 = arith.divf %278, %279 : vector<8x128xf32>
    %281 = arith.mulf %272, %249 : vector<8x128xf32>
    %282 = arith.mulf %266, %274 : vector<8x128xf32>
    %283 = arith.addf %281, %282 : vector<8x128xf32>
    %284 = math.tanh %283 : vector<8x128xf32>
    %285 = arith.mulf %280, %284 : vector<8x128xf32>
    %286 = arith.index_cast %c7_i32 : i32 to index
    %c0_80 = arith.constant 0 : index
    %c0_81 = arith.constant 0 : index
    %287 = vector.load %arg7[%286, %c0_80, %c0_81] : memref<8x8x128xf32, #tpu.memory_space<vmem>>, vector<1x8x128xf32>
    %288 = vector.shape_cast %287 : vector<1x8x128xf32> to vector<8x128xf32>
    %289 = vector.shape_cast %285 : vector<8x128xf32> to vector<1x8x128xf32>
    tpu.vector_store %arg7[%286, %c0_80, %c0_81], %289 {strides = array<i32>} : memref<8x8x128xf32, #tpu.memory_space<vmem>>, vector<1x8x128xf32>,
    %c8_i32 = arith.constant 8 : i32
    %c0_82 = arith.constant 0 : index
    %c0_83 = arith.constant 0 : index
    %c0_84 = arith.constant 0 : index
    %290 = vector.load %arg5[%c0_82, %c0_83, %c0_84] : memref<1x8x128xf32, #tpu.memory_space<vmem>>, vector<1x8x128xf32>
    %291 = vector.shape_cast %290 : vector<1x8x128xf32> to vector<8x128xf32>
    %292 = vector.shape_cast %285 : vector<8x128xf32> to vector<1x8x128xf32>
    tpu.vector_store %arg5[%c0_82, %c0_83, %c0_84], %292 {strides = array<i32>} : memref<1x8x128xf32, #tpu.memory_space<vmem>>, vector<1x8x128xf32>,
    %c0_85 = arith.constant 0 : index
    %c0_86 = arith.constant 0 : index
    %c0_87 = arith.constant 0 : index
    %293 = vector.load %arg6[%c0_85, %c0_86, %c0_87] : memref<1x8x128xf32, #tpu.memory_space<vmem>>, vector<1x8x128xf32>
    %294 = vector.shape_cast %293 : vector<1x8x128xf32> to vector<8x128xf32>
    %295 = vector.shape_cast %283 : vector<8x128xf32> to vector<1x8x128xf32>
    tpu.vector_store %arg6[%c0_85, %c0_86, %c0_87], %295 {strides = array<i32>} : memref<1x8x128xf32, #tpu.memory_space<vmem>>, vector<1x8x128xf32>,
    return
  }
  func.func @transform_0(%arg0: i32) -> (i32, i32, i32) {
    %c0_i32 = arith.constant 0 : i32
    %c0_i32_0 = arith.constant 0 : i32
    %c0_i32_1 = arith.constant 0 : i32
    %c0_i32_2 = arith.constant 0 : i32
    return %c0_i32, %c0_i32_0, %c0_i32_1 : i32, i32, i32
  }
  func.func @transform_1(%arg0: i32) -> (i32, i32, i32) {
    %c0_i32 = arith.constant 0 : i32
    %c0_i32_0 = arith.constant 0 : i32
    %c0_i32_1 = arith.constant 0 : i32
    return %arg0, %c0_i32, %c0_i32_0 : i32, i32, i32
  }
  func.func @transform_2(%arg0: i32) -> (i32, i32, i32) {
    %c0_i32 = arith.constant 0 : i32
    %c0_i32_0 = arith.constant 0 : i32
    %c0_i32_1 = arith.constant 0 : i32
    return %arg0, %c0_i32, %c0_i32_0 : i32, i32, i32
  }
  func.func @transform_3(%arg0: i32) -> (i32, i32, i32) {
    %c0_i32 = arith.constant 0 : i32
    %c0_i32_0 = arith.constant 0 : i32
    %c0_i32_1 = arith.constant 0 : i32
    return %arg0, %c0_i32, %c0_i32_0 : i32, i32, i32
  }
  func.func @transform_4(%arg0: i32) -> (i32, i32, i32) {
    %c0_i32 = arith.constant 0 : i32
    %c0_i32_0 = arith.constant 0 : i32
    %c0_i32_1 = arith.constant 0 : i32
    return %arg0, %c0_i32, %c0_i32_0 : i32, i32, i32
  }
  func.func @transform_5(%arg0: i32) -> (i32, i32, i32) {
    %c0_i32 = arith.constant 0 : i32
    %c0_i32_0 = arith.constant 0 : i32
    %c0_i32_1 = arith.constant 0 : i32
    return %arg0, %c0_i32, %c0_i32_0 : i32, i32, i32
  }
}

</mosaic_0001>

<llo_original>
// kernel: encoder_forward.1
$region0: #{encoder_forward.1}
  #allocation0 [shape = 'u32[]', space=smem, size = 0x4, offset = 0x4, fixed_abs, tag = 'smem constant byte address 0x4 - core index']
  #allocation1 [shape = 'u32[144,128]{1,0:T(1,128)}', space=vmem, size = 0x12000, scoped, tag = 'internal scratch']
  #allocation2 [shape = 'f32[8,8,128]{2,1,0:T(8,128)}', space=vmem, size = 0x8000, scoped, tag = 'scratch operand']
  #allocation3 [shape = 'f32[8,8,512]{2,1,0:T(8,128)}', space=vmem, size = 0x20000, scoped, tag = 'scratch operand']
  %s0 = inlined_call_operand.vmem [shape: f32[8,8,128], index: 0, kind: input, shape index: {}]
  %s1 = inlined_call_operand.hbm [shape: f32[2,128,512], index: 1, kind: input, shape index: {}]
  %s2 = inlined_call_operand.hbm [shape: f32[2,128,512], index: 2, kind: input, shape index: {}]
  %s3 = inlined_call_operand.vmem [shape: f32[2,1,512], index: 3, kind: input, shape index: {}]
  %s4 = inlined_call_operand.vmem [shape: f32[2,8,128], index: 4, kind: output, shape index: {0}]
  %s5 = inlined_call_operand.vmem [shape: f32[2,8,128], index: 5, kind: output, shape index: {1}]
  %6 = xla_tuple %s4, %s5
  %s7 = sld [smem:[#allocation0]]
  $region69: #{encoder_forward.1} parent=0
    _
  %s9 = ssub.s32 1, %s7
  %s10 = scalar_select 0, %s9, %s7
  $region1: #{encoder_forward.1} parent=0
    #allocation4 [shape = 'u8[524288]{0}', space=vmem, size = 0x80000, scoped, tag = 'input window, operand 1']
    #allocation5 [shape = 's32[2]{0}', space=sflag, size = 0x8, scoped, tag = 'scoped memory for encoder_forward.1']
    #allocation6 [shape = 'u8[524288]{0}', space=vmem, size = 0x80000, scoped, tag = 'input window, operand 2']
    #allocation7 [shape = 's32[2]{0}', space=sflag, size = 0x8, scoped, tag = 'scoped memory for encoder_forward.1']
    %11 = vsyncpa [#allocation5], 0
    %s12 = scalar_lea.sflag [#allocation5], 1
    %13 = vsyncpa %s12, 0
    %14 = vsyncpa [#allocation7], 0
    %s15 = scalar_lea.sflag [#allocation7], 1
    %16 = vsyncpa %s15, 0
    loop: start=0, step=1, limit=4
    $region2: #{encoder_forward.1} parent=1 // loop_pre_header
      _
    $region3: #{encoder_forward.1} parent=1 // loop_header
      %s18 = sphi 0, %s22
      %p19 = scmp.ge.s32.totalorder %s18, 4
      %s26 = sphi 0, %s26
      %s28 = sphi 0, %s26
      %s29 = sphi 0, %s28
      %s43 = sphi 0, %s29
      %s49 = sphi 0, %s51
      %s52 = sphi 0, %s49
      %s53 = sphi 0, %s52
      %s69 = sphi 0, %s53
      %s75 = sphi 0, %s77
      %s78 = sphi 0, %s75
      %s79 = sphi 0, %s78
      %s95 = sphi 0, %s79
      %s101 = sphi 0, %s103
      %s104 = sphi 0, %s101
      %s105 = sphi 0, %s104
      %s121 = sphi 0, %s105
      %s127 = sphi 0, %s129
      %s130 = sphi 0, %s127
      %s131 = sphi 0, %s130
      %s147 = sphi 0, %s131
      %s153 = sphi 0, %s155
      %s156 = sphi 0, %s153
      %s157 = sphi 0, %s156
      %s173 = sphi 0, %s157
    $region4: #{encoder_forward.1} parent=1 // loop_header_branch
      %21 = sbr.rel (%p19) target = $region8
    $region5: #{encoder_forward.1} parent=1 // loop_body
      %s23 = ssub.s32 %s18, 1
      %s24 = ssub.s32 %s18, 2
      %s25 = sadd.s32 %s18, 1
      %s27 = sadd.s32 %s26, 1
      %p30 = scmp.eq.s32.totalorder %s18, 1
      %p31 = scmp.ne.s32.totalorder %s26, %s28
      %p32 = scmp.eq.s32.totalorder %s18, 0
      %p33 = por %p31, %p32
      %p34 = scmp.ne.s32.totalorder %s26, %s28
      %p35 = scmp.eq.s32.totalorder %s23, 1
      %p36 = por %p34, %p35
      %p37 = scmp.ne.s32.totalorder %s28, %s29
      %p38 = scmp.eq.s32.totalorder %s23, 0
      %p39 = por %p37, %p38
      %p40 = scmp.ne.s32.totalorder %s28, %s29
      %p41 = scmp.eq.s32.totalorder %s24, 1
      %p42 = por %p40, %p41
      %p44 = scmp.ne.s32.totalorder %s29, %s43
      %p45 = scmp.eq.s32.totalorder %s24, 0
      %p46 = por %p44, %p45
      %s47 = ssub.s32 %s18, %s25
      %p48 = scmp.eq.s32.totalorder %s47, 0
      %s50 = sadd.s32 %s49, 1
      %s51 = scalar_select %p48, %s49, %s50
      %p54 = pneg %p48
      %p55 = scmp.eq.s32.totalorder %s18, 1
      %p56 = por %p54, %p55
      %p57 = scmp.ne.s32.totalorder %s49, %s52
      %p58 = scmp.eq.s32.totalorder %s18, 0
      %p59 = por %p57, %p58
      %p60 = scmp.ne.s32.totalorder %s49, %s52
      %p61 = scmp.eq.s32.totalorder %s23, 1
      %p62 = por %p60, %p61
      %p63 = scmp.ne.s32.totalorder %s52, %s53
      %p64 = scmp.eq.s32.totalorder %s23, 0
      %p65 = por %p63, %p64
      %p66 = scmp.ne.s32.totalorder %s52, %s53
      %p67 = scmp.eq.s32.totalorder %s24, 1
      %p68 = por %p66, %p67
      %p70 = scmp.ne.s32.totalorder %s53, %s69
      %p71 = scmp.eq.s32.totalorder %s24, 0
      %p72 = por %p70, %p71
      %s73 = ssub.s32 %s18, %s25
      %p74 = scmp.eq.s32.totalorder %s73, 0
      %s76 = sadd.s32 %s75, 1
      %s77 = scalar_select %p74, %s75, %s76
      %p80 = pneg %p74
      %p81 = scmp.eq.s32.totalorder %s18, 1
      %p82 = por %p80, %p81
      %p83 = scmp.ne.s32.totalorder %s75, %s78
      %p84 = scmp.eq.s32.totalorder %s18, 0
      %p85 = por %p83, %p84
      %p86 = scmp.ne.s32.totalorder %s75, %s78
      %p87 = scmp.eq.s32.totalorder %s23, 1
      %p88 = por %p86, %p87
      %p89 = scmp.ne.s32.totalorder %s78, %s79
      %p90 = scmp.eq.s32.totalorder %s23, 0
      %p91 = por %p89, %p90
      %p92 = scmp.ne.s32.totalorder %s78, %s79
      %p93 = scmp.eq.s32.totalorder %s24, 1
      %p94 = por %p92, %p93
      %p96 = scmp.ne.s32.totalorder %s79, %s95
      %p97 = scmp.eq.s32.totalorder %s24, 0
      %p98 = por %p96, %p97
      %s99 = ssub.s32 %s18, %s25
      %p100 = scmp.eq.s32.totalorder %s99, 0
      %s102 = sadd.s32 %s101, 1
      %s103 = scalar_select %p100, %s101, %s102
      %p106 = pneg %p100
      %p107 = scmp.eq.s32.totalorder %s18, 1
      %p108 = por %p106, %p107
      %p109 = scmp.ne.s32.totalorder %s101, %s104
      %p110 = scmp.eq.s32.totalorder %s18, 0
      %p111 = por %p109, %p110
      %p112 = scmp.ne.s32.totalorder %s101, %s104
      %p113 = scmp.eq.s32.totalorder %s23, 1
      %p114 = por %p112, %p113
      %p115 = scmp.ne.s32.totalorder %s104, %s105
      %p116 = scmp.eq.s32.totalorder %s23, 0
      %p117 = por %p115, %p116
      %p118 = scmp.ne.s32.totalorder %s104, %s105
      %p119 = scmp.eq.s32.totalorder %s24, 1
      %p120 = por %p118, %p119
      %p122 = scmp.ne.s32.totalorder %s105, %s121
      %p123 = scmp.eq.s32.totalorder %s24, 0
      %p124 = por %p122, %p123
      %s125 = ssub.s32 %s18, %s25
      %p126 = scmp.eq.s32.totalorder %s125, 0
      %s128 = sadd.s32 %s127, 1
      %s129 = scalar_select %p126, %s127, %s128
      %p132 = pneg %p126
      %p133 = scmp.eq.s32.totalorder %s18, 1
      %p134 = por %p132, %p133
      %p135 = scmp.ne.s32.totalorder %s127, %s130
      %p136 = scmp.eq.s32.totalorder %s18, 0
      %p137 = por %p135, %p136
      %p138 = scmp.ne.s32.totalorder %s127, %s130
      %p139 = scmp.eq.s32.totalorder %s23, 1
      %p140 = por %p138, %p139
      %p141 = scmp.ne.s32.totalorder %s130, %s131
      %p142 = scmp.eq.s32.totalorder %s23, 0
      %p143 = por %p141, %p142
      %p144 = scmp.ne.s32.totalorder %s130, %s131
      %p145 = scmp.eq.s32.totalorder %s24, 1
      %p146 = por %p144, %p145
      %p148 = scmp.ne.s32.totalorder %s131, %s147
      %p149 = scmp.eq.s32.totalorder %s24, 0
      %p150 = por %p148, %p149
      %s151 = ssub.s32 %s18, %s25
      %p152 = scmp.eq.s32.totalorder %s151, 0
      %s154 = sadd.s32 %s153, 1
      %s155 = scalar_select %p152, %s153, %s154
      %p158 = pneg %p152
      %p159 = scmp.eq.s32.totalorder %s18, 1
      %p160 = por %p158, %p159
      %p161 = scmp.ne.s32.totalorder %s153, %s156
      %p162 = scmp.eq.s32.totalorder %s18, 0
      %p163 = por %p161, %p162
      %p164 = scmp.ne.s32.totalorder %s153, %s156
      %p165 = scmp.eq.s32.totalorder %s23, 1
      %p166 = por %p164, %p165
      %p167 = scmp.ne.s32.totalorder %s156, %s157
      %p168 = scmp.eq.s32.totalorder %s23, 0
      %p169 = por %p167, %p168
      %p170 = scmp.ne.s32.totalorder %s156, %s157
      %p171 = scmp.eq.s32.totalorder %s24, 1
      %p172 = por %p170, %p171
      %p174 = scmp.ne.s32.totalorder %s157, %s173
      %p175 = scmp.eq.s32.totalorder %s24, 0
      %p176 = por %p174, %p175
      %p177 = scmp.le.s32.totalorder 1, %s18
      %p178 = scmp.lt.s32.totalorder %s18, 3
      %p179 = pnand %p177, %p178
      %p180 = pneg %p179
      // Predicated region
      $region9: #{encoder_forward.1} parent=5 // pred_check
        _
      $region10: #{encoder_forward.1} parent=5 // pred_check_branch
        %182 = sbr.rel (%p179) target = $region12
      $region11: #{encoder_forward.1} parent=5 // pred_region
        %s183 = ssub.s32 %s18, 1
        // Predicated region
        $region13: #{encoder_forward.1} parent=11 // pred_check
          %p184 = pneg %p39
        $region14: #{encoder_forward.1} parent=11 // pred_check_branch
          %186 = sbr.rel (%p184) target = $region16
        $region15: #{encoder_forward.1} parent=11 // pred_region
          _
        $region16: #{encoder_forward.1} parent=11 // pred_fallthru
          _
      $region12: #{encoder_forward.1} parent=5 // pred_fallthru
        _
      %p187 = scmp.lt.s32.totalorder %s18, 2
      // Predicated region
      $region17: #{encoder_forward.1} parent=5 // pred_check
        %p188 = pneg %p187
      $region18: #{encoder_forward.1} parent=5 // pred_check_branch
        %190 = sbr.rel (%p188) target = $region20
      $region19: #{encoder_forward.1} parent=5 // pred_region
        // Predicated region
        $region21: #{encoder_forward.1} parent=19 // pred_check
          %p191 = pneg %p59
        $region22: #{encoder_forward.1} parent=19 // pred_check_branch
          %193 = sbr.rel (%p191) target = $region24
        $region23: #{encoder_forward.1} parent=19 // pred_region
          %s194 = sand.u32 %s49, 1
          %s195 = scalar_lea.sflag [#allocation5], %s194
          %s196 = sand.u32 %s49, 1
          %s197 = smul.addr %s196, 512
          %s198 = scalar_lea.vmem [#allocation4], %s197
          %s200 = ssub.s32 8192, 8192
          %201 = vsyncadd %s195, %s200
          %s202 = smul.addr %s18, 64
          %s203 = smul.addr %s202, 128
          %s204 = scalar_lea.hbm %s1, %s203
          %s205 = sshll.u32 %s198, 4
          %s206 = int_to_ptr.vmem [resolvable:$true] %s205
          %211 = dma.hbm_to_vmem [thread:$0]  %s204, 8192, %s206, %s195, 512, 512, 32
        $region24: #{encoder_forward.1} parent=19 // pred_fallthru
          _
        // Predicated region
        $region25: #{encoder_forward.1} parent=19 // pred_check
          %p212 = pneg %p85
        $region26: #{encoder_forward.1} parent=19 // pred_check_branch
          %214 = sbr.rel (%p212) target = $region28
        $region27: #{encoder_forward.1} parent=19 // pred_region
          %s215 = sand.u32 %s75, 1
          %s216 = scalar_lea.sflag [#allocation7], %s215
          %s217 = sand.u32 %s75, 1
          %s218 = smul.addr %s217, 512
          %s219 = scalar_lea.vmem [#allocation6], %s218
          %s221 = ssub.s32 8192, 8192
          %222 = vsyncadd %s216, %s221
          %s223 = smul.addr %s18, 64
          %s224 = smul.addr %s223, 128
          %s225 = scalar_lea.hbm %s2, %s224
          %s226 = sshll.u32 %s219, 4
          %s227 = int_to_ptr.vmem [resolvable:$true] %s226
          %232 = dma.hbm_to_vmem [thread:$0]  %s225, 8192, %s227, %s216, 512, 512, 32
        $region28: #{encoder_forward.1} parent=19 // pred_fallthru
          _
        // Predicated region
        $region29: #{encoder_forward.1} parent=19 // pred_check
          %p233 = pneg %p111
        $region30: #{encoder_forward.1} parent=19 // pred_check_branch
          %235 = sbr.rel (%p233) target = $region32
        $region31: #{encoder_forward.1} parent=19 // pred_region
          %p236 = scmp.lt.s32.totalorder %s18, 1
          %s237 = scalar_select %p236, %s18, 1
          %s238 = smul.addr %s237, 4
          %s239 = scalar_lea.vmem %s3, %s238
        $region32: #{encoder_forward.1} parent=19 // pred_fallthru
          _
      $region20: #{encoder_forward.1} parent=5 // pred_fallthru
        _
      %p240 = scmp.le.s32.totalorder 1, %s18
      %p241 = scmp.lt.s32.totalorder %s18, 3
      %p242 = pnand %p240, %p241
      %p243 = pneg %p242
      // Predicated region
      $region33: #{encoder_forward.1} parent=5 // pred_check
        _
      $region34: #{encoder_forward.1} parent=5 // pred_check_branch
        %245 = sbr.rel (%p242) target = $region36
      $region35: #{encoder_forward.1} parent=5 // pred_region
        %s246 = ssub.s32 %s18, 1
        %s247 = sand.u32 %s52, 1
        %s248 = scalar_lea.sflag [#allocation5], %s247
        %s249 = sand.u32 %s52, 1
        %s250 = smul.addr %s249, 512
        %s251 = scalar_lea.vmem [#allocation4], %s250
        // Predicated region
        $region37: #{encoder_forward.1} parent=35 // pred_check
          %p252 = pneg %p65
        $region38: #{encoder_forward.1} parent=35 // pred_check_branch
          %254 = sbr.rel (%p252) target = $region40
        $region39: #{encoder_forward.1} parent=35 // pred_region
          %255 = dma.done %s248, 8192
        $region40: #{encoder_forward.1} parent=35 // pred_fallthru
          _
        %s256 = sand.u32 %s78, 1
        %s257 = scalar_lea.sflag [#allocation7], %s256
        %s258 = sand.u32 %s78, 1
        %s259 = smul.addr %s258, 512
        %s260 = scalar_lea.vmem [#allocation6], %s259
        // Predicated region
        $region41: #{encoder_forward.1} parent=35 // pred_check
          %p261 = pneg %p91
        $region42: #{encoder_forward.1} parent=35 // pred_check_branch
          %263 = sbr.rel (%p261) target = $region44
        $region43: #{encoder_forward.1} parent=35 // pred_region
          %264 = dma.done %s257, 8192
        $region44: #{encoder_forward.1} parent=35 // pred_fallthru
          _
        %p265 = pneg %p39
        %p266 = pneg %p36
        %s267 = sand.u32 %s52, 1
        %s268 = scalar_lea.sflag [#allocation5], %s267
        %s269 = sand.u32 %s52, 1
        %s270 = smul.addr %s269, 512
        %s271 = scalar_lea.vmem [#allocation4], %s270
        %p272 = pneg %p65
        %p273 = pneg %p62
        %s274 = sand.u32 %s78, 1
        %s275 = scalar_lea.sflag [#allocation7], %s274
        %s276 = sand.u32 %s78, 1
        %s277 = smul.addr %s276, 512
        %s278 = scalar_lea.vmem [#allocation6], %s277
        %p279 = pneg %p91
        %p280 = pneg %p88
        %p281 = scmp.lt.s32.totalorder %s23, 1
        %s282 = scalar_select %p281, %s23, 1
        %s283 = smul.addr %s282, 4
        %s284 = scalar_lea.vmem %s3, %s283
        %p285 = pneg %p117
        %p286 = pneg %p114
        %p287 = pneg %p143
        %p288 = pneg %p140
        %p289 = scmp.lt.s32.totalorder %s23, 1
        %s290 = scalar_select %p289, %s23, 1
        %s291 = smul.addr %s290, 8
        %s292 = scalar_lea.vmem %s4, %s291
        %p293 = pneg %p169
        %p294 = pneg %p166
        %p295 = scmp.lt.s32.totalorder %s23, 1
        %s296 = scalar_select %p295, %s23, 1
        %s297 = smul.addr %s296, 8
        %s298 = scalar_lea.vmem %s5, %s297
        %p299 = scmp.lt.s32.totalorder %s23, 1
        %s300 = scalar_select %p299, %s23, 1
        %s301 = smul.addr %s300, 4
        %s302 = scalar_lea.vmem %s3, %s301
        %p303 = scmp.lt.s32.totalorder %s23, 1
        %s304 = scalar_select %p303, %s23, 1
        %s305 = smul.addr %s304, 8
        %s306 = scalar_lea.vmem %s4, %s305
        %p307 = scmp.lt.s32.totalorder %s23, 1
        %s308 = scalar_select %p307, %s23, 1
        %s309 = smul.addr %s308, 8
        %s310 = scalar_lea.vmem %s5, %s309
        %p311 = scmp.eq.s32.totalorder %s23, 0
        // Predicated region
        $region45: #{encoder_forward.1} parent=35 // pred_check
          %p312 = pneg %p311
        $region46: #{encoder_forward.1} parent=35 // pred_check_branch
          %314 = sbr.rel (%p312) target = $region48
        $region47: #{encoder_forward.1} parent=35 // pred_region
          %v315 = vld [vmem:[%s0] sm:$0xff]
          %v316 = vld [vmem:[%s0 + $0x8] sm:$0xff]
          %v317 = vld [vmem:[%s0 + $0x10] sm:$0xff]
          %v318 = vld [vmem:[%s0 + $0x18] sm:$0xff]
          %v319 = vld [vmem:[%s0 + $0x20] sm:$0xff]
          %v320 = vld [vmem:[%s0 + $0x28] sm:$0xff]
          %v321 = vld [vmem:[%s0 + $0x30] sm:$0xff]
          %v322 = vld [vmem:[%s0 + $0x38] sm:$0xff]
          %323 = vst [vmem:[#allocation2] sm:$0xff] %v315
          %324 = vst [vmem:[#allocation2 + $0x8] sm:$0xff] %v316
          %325 = vst [vmem:[#allocation2 + $0x10] sm:$0xff] %v317
          %326 = vst [vmem:[#allocation2 + $0x18] sm:$0xff] %v318
          %327 = vst [vmem:[#allocation2 + $0x20] sm:$0xff] %v319
          %328 = vst [vmem:[#allocation2 + $0x28] sm:$0xff] %v320
          %329 = vst [vmem:[#allocation2 + $0x30] sm:$0xff] %v321
          %330 = vst [vmem:[#allocation2 + $0x38] sm:$0xff] %v322
        $region48: #{encoder_forward.1} parent=35 // pred_fallthru
          _
        %v331 = vld [vmem:[%s251] sm:$0xff]
        %v332 = vld [vmem:[%s251 + $0x8] sm:$0xff]
        %v333 = vld [vmem:[%s251 + $0x10] sm:$0xff]
        %v334 = vld [vmem:[%s251 + $0x18] sm:$0xff]
        %v335 = vld [vmem:[%s251 + $0x20] sm:$0xff]
        %v336 = vld [vmem:[%s251 + $0x28] sm:$0xff]
        %v337 = vld [vmem:[%s251 + $0x30] sm:$0xff]
        %v338 = vld [vmem:[%s251 + $0x38] sm:$0xff]
        %v339 = vld [vmem:[%s251 + $0x40] sm:$0xff]
        %v340 = vld [vmem:[%s251 + $0x48] sm:$0xff]
        %v341 = vld [vmem:[%s251 + $0x50] sm:$0xff]
        %v342 = vld [vmem:[%s251 + $0x58] sm:$0xff]
        %v343 = vld [vmem:[%s251 + $0x60] sm:$0xff]
        %v344 = vld [vmem:[%s251 + $0x68] sm:$0xff]
        %v345 = vld [vmem:[%s251 + $0x70] sm:$0xff]
        %v346 = vld [vmem:[%s251 + $0x78] sm:$0xff]
        %v347 = vld [vmem:[%s251 + $0x80] sm:$0xff]
        %v348 = vld [vmem:[%s251 + $0x88] sm:$0xff]
        %v349 = vld [vmem:[%s251 + $0x90] sm:$0xff]
        %v350 = vld [vmem:[%s251 + $0x98] sm:$0xff]
        %v351 = vld [vmem:[%s251 + $0xa0] sm:$0xff]
        %v352 = vld [vmem:[%s251 + $0xa8] sm:$0xff]
        %v353 = vld [vmem:[%s251 + $0xb0] sm:$0xff]
        %v354 = vld [vmem:[%s251 + $0xb8] sm:$0xff]
        %v355 = vld [vmem:[%s251 + $0xc0] sm:$0xff]
        %v356 = vld [vmem:[%s251 + $0xc8] sm:$0xff]
        %v357 = vld [vmem:[%s251 + $0xd0] sm:$0xff]
        %v358 = vld [vmem:[%s251 + $0xd8] sm:$0xff]
        %v359 = vld [vmem:[%s251 + $0xe0] sm:$0xff]
        %v360 = vld [vmem:[%s251 + $0xe8] sm:$0xff]
        %v361 = vld [vmem:[%s251 + $0xf0] sm:$0xff]
        %v362 = vld [vmem:[%s251 + $0xf8] sm:$0xff]
        %v363 = vld [vmem:[%s251 + $0x100] sm:$0xff]
        %v364 = vld [vmem:[%s251 + $0x108] sm:$0xff]
        %v365 = vld [vmem:[%s251 + $0x110] sm:$0xff]
        %v366 = vld [vmem:[%s251 + $0x118] sm:$0xff]
        %v367 = vld [vmem:[%s251 + $0x120] sm:$0xff]
        %v368 = vld [vmem:[%s251 + $0x128] sm:$0xff]
        %v369 = vld [vmem:[%s251 + $0x130] sm:$0xff]
        %v370 = vld [vmem:[%s251 + $0x138] sm:$0xff]
        %v371 = vld [vmem:[%s251 + $0x140] sm:$0xff]
        %v372 = vld [vmem:[%s251 + $0x148] sm:$0xff]
        %v373 = vld [vmem:[%s251 + $0x150] sm:$0xff]
        %v374 = vld [vmem:[%s251 + $0x158] sm:$0xff]
        %v375 = vld [vmem:[%s251 + $0x160] sm:$0xff]
        %v376 = vld [vmem:[%s251 + $0x168] sm:$0xff]
        %v377 = vld [vmem:[%s251 + $0x170] sm:$0xff]
        %v378 = vld [vmem:[%s251 + $0x178] sm:$0xff]
        %v379 = vld [vmem:[%s251 + $0x180] sm:$0xff]
        %v380 = vld [vmem:[%s251 + $0x188] sm:$0xff]
        %v381 = vld [vmem:[%s251 + $0x190] sm:$0xff]
        %v382 = vld [vmem:[%s251 + $0x198] sm:$0xff]
        %v383 = vld [vmem:[%s251 + $0x1a0] sm:$0xff]
        %v384 = vld [vmem:[%s251 + $0x1a8] sm:$0xff]
        %v385 = vld [vmem:[%s251 + $0x1b0] sm:$0xff]
        %v386 = vld [vmem:[%s251 + $0x1b8] sm:$0xff]
        %v387 = vld [vmem:[%s251 + $0x1c0] sm:$0xff]
        %v388 = vld [vmem:[%s251 + $0x1c8] sm:$0xff]
        %v389 = vld [vmem:[%s251 + $0x1d0] sm:$0xff]
        %v390 = vld [vmem:[%s251 + $0x1d8] sm:$0xff]
        %v391 = vld [vmem:[%s251 + $0x1e0] sm:$0xff]
        %v392 = vld [vmem:[%s251 + $0x1e8] sm:$0xff]
        %v393 = vld [vmem:[%s251 + $0x1f0] sm:$0xff]
        %v394 = vld [vmem:[%s251 + $0x1f8] sm:$0xff]
        %v395 = vld [vmem:[%s260] sm:$0xff]
        %v396 = vld [vmem:[%s260 + $0x8] sm:$0xff]
        %v397 = vld [vmem:[%s260 + $0x10] sm:$0xff]
        %v398 = vld [vmem:[%s260 + $0x18] sm:$0xff]
        %v399 = vld [vmem:[%s260 + $0x20] sm:$0xff]
        %v400 = vld [vmem:[%s260 + $0x28] sm:$0xff]
        %v401 = vld [vmem:[%s260 + $0x30] sm:$0xff]
        %v402 = vld [vmem:[%s260 + $0x38] sm:$0xff]
        %v403 = vld [vmem:[%s260 + $0x40] sm:$0xff]
        %v404 = vld [vmem:[%s260 + $0x48] sm:$0xff]
        %v405 = vld [vmem:[%s260 + $0x50] sm:$0xff]
        %v406 = vld [vmem:[%s260 + $0x58] sm:$0xff]
        %v407 = vld [vmem:[%s260 + $0x60] sm:$0xff]
        %v408 = vld [vmem:[%s260 + $0x68] sm:$0xff]
        %v409 = vld [vmem:[%s260 + $0x70] sm:$0xff]
        %v410 = vld [vmem:[%s260 + $0x78] sm:$0xff]
        %v411 = vld [vmem:[%s260 + $0x80] sm:$0xff]
        %v412 = vld [vmem:[%s260 + $0x88] sm:$0xff]
        %v413 = vld [vmem:[%s260 + $0x90] sm:$0xff]
        %v414 = vld [vmem:[%s260 + $0x98] sm:$0xff]
        %v415 = vld [vmem:[%s260 + $0xa0] sm:$0xff]
        %v416 = vld [vmem:[%s260 + $0xa8] sm:$0xff]
        %v417 = vld [vmem:[%s260 + $0xb0] sm:$0xff]
        %v418 = vld [vmem:[%s260 + $0xb8] sm:$0xff]
        %v419 = vld [vmem:[%s260 + $0xc0] sm:$0xff]
        %v420 = vld [vmem:[%s260 + $0xc8] sm:$0xff]
        %v421 = vld [vmem:[%s260 + $0xd0] sm:$0xff]
        %v422 = vld [vmem:[%s260 + $0xd8] sm:$0xff]
        %v423 = vld [vmem:[%s260 + $0xe0] sm:$0xff]
        %v424 = vld [vmem:[%s260 + $0xe8] sm:$0xff]
        %v425 = vld [vmem:[%s260 + $0xf0] sm:$0xff]
        %v426 = vld [vmem:[%s260 + $0xf8] sm:$0xff]
        %v427 = vld [vmem:[%s260 + $0x100] sm:$0xff]
        %v428 = vld [vmem:[%s260 + $0x108] sm:$0xff]
        %v429 = vld [vmem:[%s260 + $0x110] sm:$0xff]
        %v430 = vld [vmem:[%s260 + $0x118] sm:$0xff]
        %v431 = vld [vmem:[%s260 + $0x120] sm:$0xff]
        %v432 = vld [vmem:[%s260 + $0x128] sm:$0xff]
        %v433 = vld [vmem:[%s260 + $0x130] sm:$0xff]
        %v434 = vld [vmem:[%s260 + $0x138] sm:$0xff]
        %v435 = vld [vmem:[%s260 + $0x140] sm:$0xff]
        %v436 = vld [vmem:[%s260 + $0x148] sm:$0xff]
        %v437 = vld [vmem:[%s260 + $0x150] sm:$0xff]
        %v438 = vld [vmem:[%s260 + $0x158] sm:$0xff]
        %v439 = vld [vmem:[%s260 + $0x160] sm:$0xff]
        %v440 = vld [vmem:[%s260 + $0x168] sm:$0xff]
        %v441 = vld [vmem:[%s260 + $0x170] sm:$0xff]
        %v442 = vld [vmem:[%s260 + $0x178] sm:$0xff]
        %v443 = vld [vmem:[%s260 + $0x180] sm:$0xff]
        %v444 = vld [vmem:[%s260 + $0x188] sm:$0xff]
        %v445 = vld [vmem:[%s260 + $0x190] sm:$0xff]
        %v446 = vld [vmem:[%s260 + $0x198] sm:$0xff]
        %v447 = vld [vmem:[%s260 + $0x1a0] sm:$0xff]
        %v448 = vld [vmem:[%s260 + $0x1a8] sm:$0xff]
        %v449 = vld [vmem:[%s260 + $0x1b0] sm:$0xff]
        %v450 = vld [vmem:[%s260 + $0x1b8] sm:$0xff]
        %v451 = vld [vmem:[%s260 + $0x1c0] sm:$0xff]
        %v452 = vld [vmem:[%s260 + $0x1c8] sm:$0xff]
        %v453 = vld [vmem:[%s260 + $0x1d0] sm:$0xff]
        %v454 = vld [vmem:[%s260 + $0x1d8] sm:$0xff]
        %v455 = vld [vmem:[%s260 + $0x1e0] sm:$0xff]
        %v456 = vld [vmem:[%s260 + $0x1e8] sm:$0xff]
        %v457 = vld [vmem:[%s260 + $0x1f0] sm:$0xff]
        %v458 = vld [vmem:[%s260 + $0x1f8] sm:$0xff]
        %v459 = vld [vmem:[%s302] sm:$0xf]
        %v460 = vld [vmem:[#allocation2] sm:$0xff]
        %v461 = vld [vmem:[#allocation2 + $0x8] sm:$0xff]
        %v462 = vld [vmem:[#allocation2 + $0x10] sm:$0xff]
        %v463 = vld [vmem:[#allocation2 + $0x18] sm:$0xff]
        %v464 = vld [vmem:[#allocation2 + $0x20] sm:$0xff]
        %v465 = vld [vmem:[#allocation2 + $0x28] sm:$0xff]
        %v466 = vld [vmem:[#allocation2 + $0x30] sm:$0xff]
        %v467 = vld [vmem:[#allocation2 + $0x38] sm:$0xff]
        %v469 = vlaneseq
        %v470 = vshrl.u32 %v469, 7
        %v471 = vsub.s32 0, %v470
        %v472 = vrot.slane %v459, %v471
        %v473 = vlaneseq
        %v474 = vshrl.u32 %v473, 7
        %v475 = vsub.s32 1, %v474
        %v476 = vrot.slane %v459, %v475
        %v477 = vlaneseq
        %v478 = vshrl.u32 %v477, 7
        %v479 = vsub.s32 2, %v478
        %v480 = vrot.slane %v459, %v479
        %v481 = vlaneseq
        %v482 = vshrl.u32 %v481, 7
        %v483 = vsub.s32 3, %v482
        %v484 = vrot.slane %v459, %v483
        %489 = vmatprep.subr.mxu0 %v332
        %490 = vmatpush1.msra.mxu0 %v331
        %491 = vmatprep.subr.mxu0 %v336
        %492 = vmatpush1.msra.mxu0 %v335
        %493 = vmatprep.subr.mxu0 %v340
        %494 = vmatpush1.msra.mxu0 %v339
        %495 = vmatprep.subr.mxu0 %v344
        %496 = vmatpush1.msra.mxu0 %v343
        %497 = vmatprep.subr.mxu0 %v348
        %498 = vmatpush1.msra.mxu0 %v347
        %499 = vmatprep.subr.mxu0 %v352
        %500 = vmatpush1.msra.mxu0 %v351
        %501 = vmatprep.subr.mxu0 %v356
        %502 = vmatpush1.msra.mxu0 %v355
        %503 = vmatprep.subr.mxu0 %v360
        %504 = vmatpush1.msra.mxu0 %v359
        %505 = vmatprep.subr.mxu0 %v364
        %506 = vmatpush1.msra.mxu0 %v363
        %507 = vmatprep.subr.mxu0 %v368
        %508 = vmatpush1.msra.mxu0 %v367
        %509 = vmatprep.subr.mxu0 %v372
        %510 = vmatpush1.msra.mxu0 %v371
        %511 = vmatprep.subr.mxu0 %v376
        %512 = vmatpush1.msra.mxu0 %v375
        %513 = vmatprep.subr.mxu0 %v380
        %514 = vmatpush1.msra.mxu0 %v379
        %515 = vmatprep.subr.mxu0 %v384
        %516 = vmatpush1.msra.mxu0 %v383
        %517 = vmatprep.subr.mxu0 %v388
        %518 = vmatpush1.msra.mxu0 %v387
        %519 = vmatprep.subr.mxu0 %v392
        %520 = vmatpush1.msra.mxu0 %v391
        %521 = vmatprep.subr.mxu0 0.0
        %522 = vmatpush1.msra.mxu0 0.0
        %523 = vmatprep.subr.mxu0 0.0
        %524 = vmatpush1.msra.mxu0 0.0
        %525 = vmatprep.subr.mxu0 0.0
        %526 = vmatpush1.msra.mxu0 0.0
        %527 = vmatprep.subr.mxu0 0.0
        %528 = vmatpush1.msra.mxu0 0.0
        %529 = vmatprep.subr.mxu0 0.0
        %530 = vmatpush1.msra.mxu0 0.0
        %531 = vmatprep.subr.mxu0 0.0
        %532 = vmatpush1.msra.mxu0 0.0
        %533 = vmatprep.subr.mxu0 0.0
        %534 = vmatpush1.msra.mxu0 0.0
        %535 = vmatprep.subr.mxu0 0.0
        %536 = vmatpush1.msra.mxu0 0.0
        %537 = vmatprep.subr.mxu0 0.0
        %538 = vmatpush1.msra.mxu0 0.0
        %539 = vmatprep.subr.mxu0 0.0
        %540 = vmatpush1.msra.mxu0 0.0
        %541 = vmatprep.subr.mxu0 0.0
        %542 = vmatpush1.msra.mxu0 0.0
        %543 = vmatprep.subr.mxu0 0.0
        %544 = vmatpush1.msra.mxu0 0.0
        %545 = vmatprep.subr.mxu0 0.0
        %546 = vmatpush1.msra.mxu0 0.0
        %547 = vmatprep.subr.mxu0 0.0
        %548 = vmatpush1.msra.mxu0 0.0
        %549 = vmatprep.subr.mxu0 0.0
        %550 = vmatpush1.msra.mxu0 0.0
        %551 = vmatprep.subr.mxu0 0.0
        %552 = vmatpush1.msra.mxu0 0.0
        %553 = vmatprep.mubr.f32.mxu0 0.0
        %554 = vmatmul.mubr.f32.gmra.mrb[0].mxu0 %v460
        %v555 = vpop.f32.mrb[0].mxu0
        %v556 = vadd.f32 %v472, %v555
        %v557 = vpop.f32.mrb[0].mxu0
        %v558 = vadd.f32 %v476, %v557
        %559 = vmatprep.mubr.f32.mxu0 0.0
        %560 = vmatmul.mubr.f32.gmra.mrb[0].mxu0 %v461
        %v561 = vpop.f32.mrb[0].mxu0
        %v562 = vadd.f32 %v472, %v561
        %v563 = vpop.f32.mrb[0].mxu0
        %v564 = vadd.f32 %v476, %v563
        %565 = vmatprep.mubr.f32.mxu0 0.0
        %566 = vmatmul.mubr.f32.gmra.mrb[0].mxu0 %v462
        %v567 = vpop.f32.mrb[0].mxu0
        %v568 = vadd.f32 %v472, %v567
        %v569 = vpop.f32.mrb[0].mxu0
        %v570 = vadd.f32 %v476, %v569
        %571 = vmatprep.mubr.f32.mxu0 0.0
        %572 = vmatmul.mubr.f32.gmra.mrb[0].mxu0 %v463
        %v573 = vpop.f32.mrb[0].mxu0
        %v574 = vadd.f32 %v472, %v573
        %v575 = vpop.f32.mrb[0].mxu0
        %v576 = vadd.f32 %v476, %v575
        %577 = vmatprep.mubr.f32.mxu0 0.0
        %578 = vmatmul.mubr.f32.gmra.mrb[0].mxu0 %v464
        %v579 = vpop.f32.mrb[0].mxu0
        %v580 = vadd.f32 %v472, %v579
        %v581 = vpop.f32.mrb[0].mxu0
        %v582 = vadd.f32 %v476, %v581
        %583 = vmatprep.mubr.f32.mxu0 0.0
        %584 = vmatmul.mubr.f32.gmra.mrb[0].mxu0 %v465
        %v585 = vpop.f32.mrb[0].mxu0
        %v586 = vadd.f32 %v472, %v585
        %v587 = vpop.f32.mrb[0].mxu0
        %v588 = vadd.f32 %v476, %v587
        %589 = vmatprep.mubr.f32.mxu0 0.0
        %590 = vmatmul.mubr.f32.gmra.mrb[0].mxu0 %v466
        %v591 = vpop.f32.mrb[0].mxu0
        %v592 = vadd.f32 %v472, %v591
        %v593 = vpop.f32.mrb[0].mxu0
        %v594 = vadd.f32 %v476, %v593
        %595 = vmatprep.mubr.f32.mxu0 0.0
        %596 = vmatmul.mubr.f32.gmra.mrb[0].mxu0 %v467
        %v597 = vpop.f32.mrb[0].mxu0
        %v598 = vadd.f32 %v472, %v597
        %v599 = vpop.f32.mrb[0].mxu0
        %v600 = vadd.f32 %v476, %v599
        %601 = vdwg.mxu0
        %602 = vmatprep.subr.mxu0 %v334
        %603 = vmatpush1.msra.mxu0 %v333
        %604 = vmatprep.subr.mxu0 %v338
        %605 = vmatpush1.msra.mxu0 %v337
        %606 = vmatprep.subr.mxu0 %v342
        %607 = vmatpush1.msra.mxu0 %v341
        %608 = vmatprep.subr.mxu0 %v346
        %609 = vmatpush1.msra.mxu0 %v345
        %610 = vmatprep.subr.mxu0 %v350
        %611 = vmatpush1.msra.mxu0 %v349
        %612 = vmatprep.subr.mxu0 %v354
        %613 = vmatpush1.msra.mxu0 %v353
        %614 = vmatprep.subr.mxu0 %v358
        %615 = vmatpush1.msra.mxu0 %v357
        %616 = vmatprep.subr.mxu0 %v362
        %617 = vmatpush1.msra.mxu0 %v361
        %618 = vmatprep.subr.mxu0 %v366
        %619 = vmatpush1.msra.mxu0 %v365
        %620 = vmatprep.subr.mxu0 %v370
        %621 = vmatpush1.msra.mxu0 %v369
        %622 = vmatprep.subr.mxu0 %v374
        %623 = vmatpush1.msra.mxu0 %v373
        %624 = vmatprep.subr.mxu0 %v378
        %625 = vmatpush1.msra.mxu0 %v377
        %626 = vmatprep.subr.mxu0 %v382
        %627 = vmatpush1.msra.mxu0 %v381
        %628 = vmatprep.subr.mxu0 %v386
        %629 = vmatpush1.msra.mxu0 %v385
        %630 = vmatprep.subr.mxu0 %v390
        %631 = vmatpush1.msra.mxu0 %v389
        %632 = vmatprep.subr.mxu0 %v394
        %633 = vmatpush1.msra.mxu0 %v393
        %634 = vmatprep.subr.mxu0 0.0
        %635 = vmatpush1.msra.mxu0 0.0
        %636 = vmatprep.subr.mxu0 0.0
        %637 = vmatpush1.msra.mxu0 0.0
        %638 = vmatprep.subr.mxu0 0.0
        %639 = vmatpush1.msra.mxu0 0.0
        %640 = vmatprep.subr.mxu0 0.0
        %641 = vmatpush1.msra.mxu0 0.0
        %642 = vmatprep.subr.mxu0 0.0
        %643 = vmatpush1.msra.mxu0 0.0
        %644 = vmatprep.subr.mxu0 0.0
        %645 = vmatpush1.msra.mxu0 0.0
        %646 = vmatprep.subr.mxu0 0.0
        %647 = vmatpush1.msra.mxu0 0.0
        %648 = vmatprep.subr.mxu0 0.0
        %649 = vmatpush1.msra.mxu0 0.0
        %650 = vmatprep.subr.mxu0 0.0
        %651 = vmatpush1.msra.mxu0 0.0
        %652 = vmatprep.subr.mxu0 0.0
        %653 = vmatpush1.msra.mxu0 0.0
        %654 = vmatprep.subr.mxu0 0.0
        %655 = vmatpush1.msra.mxu0 0.0
        %656 = vmatprep.subr.mxu0 0.0
        %657 = vmatpush1.msra.mxu0 0.0
        %658 = vmatprep.subr.mxu0 0.0
        %659 = vmatpush1.msra.mxu0 0.0
        %660 = vmatprep.subr.mxu0 0.0
        %661 = vmatpush1.msra.mxu0 0.0
        %662 = vmatprep.subr.mxu0 0.0
        %663 = vmatpush1.msra.mxu0 0.0
        %664 = vmatprep.subr.mxu0 0.0
        %665 = vmatpush1.msra.mxu0 0.0
        %666 = vmatprep.mubr.f32.mxu0 0.0
        %667 = vmatmul.mubr.f32.gmra.mrb[0].mxu0 %v460
        %v668 = vpop.f32.mrb[0].mxu0
        %v669 = vadd.f32 %v480, %v668
        %v670 = vpop.f32.mrb[0].mxu0
        %v671 = vadd.f32 %v484, %v670
        %672 = vmatprep.mubr.f32.mxu0 0.0
        %673 = vmatmul.mubr.f32.gmra.mrb[0].mxu0 %v461
        %v674 = vpop.f32.mrb[0].mxu0
        %v675 = vadd.f32 %v480, %v674
        %v676 = vpop.f32.mrb[0].mxu0
        %v677 = vadd.f32 %v484, %v676
        %678 = vmatprep.mubr.f32.mxu0 0.0
        %679 = vmatmul.mubr.f32.gmra.mrb[0].mxu0 %v462
        %v680 = vpop.f32.mrb[0].mxu0
        %v681 = vadd.f32 %v480, %v680
        %v682 = vpop.f32.mrb[0].mxu0
        %v683 = vadd.f32 %v484, %v682
        %684 = vmatprep.mubr.f32.mxu0 0.0
        %685 = vmatmul.mubr.f32.gmra.mrb[0].mxu0 %v463
        %v686 = vpop.f32.mrb[0].mxu0
        %v687 = vadd.f32 %v480, %v686
        %v688 = vpop.f32.mrb[0].mxu0
        %v689 = vadd.f32 %v484, %v688
        %690 = vmatprep.mubr.f32.mxu0 0.0
        %691 = vmatmul.mubr.f32.gmra.mrb[0].mxu0 %v464
        %v692 = vpop.f32.mrb[0].mxu0
        %v693 = vadd.f32 %v480, %v692
        %v694 = vpop.f32.mrb[0].mxu0
        %v695 = vadd.f32 %v484, %v694
        %696 = vmatprep.mubr.f32.mxu0 0.0
        %697 = vmatmul.mubr.f32.gmra.mrb[0].mxu0 %v465
        %v698 = vpop.f32.mrb[0].mxu0
        %v699 = vadd.f32 %v480, %v698
        %v700 = vpop.f32.mrb[0].mxu0
        %v701 = vadd.f32 %v484, %v700
        %702 = vmatprep.mubr.f32.mxu0 0.0
        %703 = vmatmul.mubr.f32.gmra.mrb[0].mxu0 %v466
        %v704 = vpop.f32.mrb[0].mxu0
        %v705 = vadd.f32 %v480, %v704
        %v706 = vpop.f32.mrb[0].mxu0
        %v707 = vadd.f32 %v484, %v706
        %708 = vmatprep.mubr.f32.mxu0 0.0
        %709 = vmatmul.mubr.f32.gmra.mrb[0].mxu0 %v467
        %v710 = vpop.f32.mrb[0].mxu0
        %v711 = vadd.f32 %v480, %v710
        %v712 = vpop.f32.mrb[0].mxu0
        %v713 = vadd.f32 %v484, %v712
        %714 = vdwg.mxu0
        %715 = vst [vmem:[#allocation3] sm:$0xff] %v556
        %716 = vst [vmem:[#allocation3 + $0x8] sm:$0xff] %v558
        %717 = vst [vmem:[#allocation3 + $0x10] sm:$0xff] %v669
        %718 = vst [vmem:[#allocation3 + $0x18] sm:$0xff] %v671
        %719 = vst [vmem:[#allocation3 + $0x20] sm:$0xff] %v562
        %720 = vst [vmem:[#allocation3 + $0x28] sm:$0xff] %v564
        %721 = vst [vmem:[#allocation3 + $0x30] sm:$0xff] %v675
        %722 = vst [vmem:[#allocation3 + $0x38] sm:$0xff] %v677
        %723 = vst [vmem:[#allocation3 + $0x40] sm:$0xff] %v568
        %724 = vst [vmem:[#allocation3 + $0x48] sm:$0xff] %v570
        %725 = vst [vmem:[#allocation3 + $0x50] sm:$0xff] %v681
        %726 = vst [vmem:[#allocation3 + $0x58] sm:$0xff] %v683
        %727 = vst [vmem:[#allocation3 + $0x60] sm:$0xff] %v574
        %728 = vst [vmem:[#allocation3 + $0x68] sm:$0xff] %v576
        %729 = vst [vmem:[#allocation3 + $0x70] sm:$0xff] %v687
        %730 = vst [vmem:[#allocation3 + $0x78] sm:$0xff] %v689
        %731 = vst [vmem:[#allocation3 + $0x80] sm:$0xff] %v580
        %732 = vst [vmem:[#allocation3 + $0x88] sm:$0xff] %v582
        %733 = vst [vmem:[#allocation3 + $0x90] sm:$0xff] %v693
        %734 = vst [vmem:[#allocation3 + $0x98] sm:$0xff] %v695
        %735 = vst [vmem:[#allocation3 + $0xa0] sm:$0xff] %v586
        %736 = vst [vmem:[#allocation3 + $0xa8] sm:$0xff] %v588
        %737 = vst [vmem:[#allocation3 + $0xb0] sm:$0xff] %v699
        %738 = vst [vmem:[#allocation3 + $0xb8] sm:$0xff] %v701
        %739 = vst [vmem:[#allocation3 + $0xc0] sm:$0xff] %v592
        %740 = vst [vmem:[#allocation3 + $0xc8] sm:$0xff] %v594
        %741 = vst [vmem:[#allocation3 + $0xd0] sm:$0xff] %v705
        %742 = vst [vmem:[#allocation3 + $0xd8] sm:$0xff] %v707
        %743 = vst [vmem:[#allocation3 + $0xe0] sm:$0xff] %v598
        %744 = vst [vmem:[#allocation3 + $0xe8] sm:$0xff] %v600
        %745 = vst [vmem:[#allocation3 + $0xf0] sm:$0xff] %v711
        %746 = vst [vmem:[#allocation3 + $0xf8] sm:$0xff] %v713
        %v747 = vld [vmem:[#allocation3] sm:$0xff]
        %v748 = vld [vmem:[#allocation3 + $0x8] sm:$0xff]
        %v749 = vld [vmem:[#allocation3 + $0x10] sm:$0xff]
        %v750 = vld [vmem:[#allocation3 + $0x18] sm:$0xff]
        %751 = vmatprep.subr.mxu0 %v396
        %752 = vmatpush1.msra.mxu0 %v395
        %753 = vmatprep.subr.mxu0 %v400
        %754 = vmatpush1.msra.mxu0 %v399
        %755 = vmatprep.subr.mxu0 %v404
        %756 = vmatpush1.msra.mxu0 %v403
        %757 = vmatprep.subr.mxu0 %v408
        %758 = vmatpush1.msra.mxu0 %v407
        %759 = vmatprep.subr.mxu0 %v412
        %760 = vmatpush1.msra.mxu0 %v411
        %761 = vmatprep.subr.mxu0 %v416
        %762 = vmatpush1.msra.mxu0 %v415
        %763 = vmatprep.subr.mxu0 %v420
        %764 = vmatpush1.msra.mxu0 %v419
        %765 = vmatprep.subr.mxu0 %v424
        %766 = vmatpush1.msra.mxu0 %v423
        %767 = vmatprep.subr.mxu0 %v428
        %768 = vmatpush1.msra.mxu0 %v427
        %769 = vmatprep.subr.mxu0 %v432
        %770 = vmatpush1.msra.mxu0 %v431
        %771 = vmatprep.subr.mxu0 %v436
        %772 = vmatpush1.msra.mxu0 %v435
        %773 = vmatprep.subr.mxu0 %v440
        %774 = vmatpush1.msra.mxu0 %v439
        %775 = vmatprep.subr.mxu0 %v444
        %776 = vmatpush1.msra.mxu0 %v443
        %777 = vmatprep.subr.mxu0 %v448
        %778 = vmatpush1.msra.mxu0 %v447
        %779 = vmatprep.subr.mxu0 %v452
        %780 = vmatpush1.msra.mxu0 %v451
        %781 = vmatprep.subr.mxu0 %v456
        %782 = vmatpush1.msra.mxu0 %v455
        %783 = vmatprep.subr.mxu0 0.0
        %784 = vmatpush1.msra.mxu0 0.0
        %785 = vmatprep.subr.mxu0 0.0
        %786 = vmatpush1.msra.mxu0 0.0
        %787 = vmatprep.subr.mxu0 0.0
        %788 = vmatpush1.msra.mxu0 0.0
        %789 = vmatprep.subr.mxu0 0.0
        %790 = vmatpush1.msra.mxu0 0.0
        %791 = vmatprep.subr.mxu0 0.0
        %792 = vmatpush1.msra.mxu0 0.0
        %793 = vmatprep.subr.mxu0 0.0
        %794 = vmatpush1.msra.mxu0 0.0
        %795 = vmatprep.subr.mxu0 0.0
        %796 = vmatpush1.msra.mxu0 0.0
        %797 = vmatprep.subr.mxu0 0.0
        %798 = vmatpush1.msra.mxu0 0.0
        %799 = vmatprep.subr.mxu0 0.0
        %800 = vmatpush1.msra.mxu0 0.0
        %801 = vmatprep.subr.mxu0 0.0
        %802 = vmatpush1.msra.mxu0 0.0
        %803 = vmatprep.subr.mxu0 0.0
        %804 = vmatpush1.msra.mxu0 0.0
        %805 = vmatprep.subr.mxu0 0.0
        %806 = vmatpush1.msra.mxu0 0.0
        %807 = vmatprep.subr.mxu0 0.0
        %808 = vmatpush1.msra.mxu0 0.0
        %809 = vmatprep.subr.mxu0 0.0
        %810 = vmatpush1.msra.mxu0 0.0
        %811 = vmatprep.subr.mxu0 0.0
        %812 = vmatpush1.msra.mxu0 0.0
        %813 = vmatprep.subr.mxu0 0.0
        %814 = vmatpush1.msra.mxu0 0.0
        %815 = vmatprep.mubr.f32.mxu0 0.0
        %816 = vmatmul.mubr.f32.gmra.mrb[0].mxu0 0.0
        %v817 = vpop.f32.mrb[0].mxu0
        %v818 = vadd.f32 0.0, %v817
        %v819 = vpop.f32.mrb[0].mxu0
        %v820 = vadd.f32 0.0, %v819
        %821 = vdwg.mxu0
        %822 = vmatprep.subr.mxu0 %v398
        %823 = vmatpush1.msra.mxu0 %v397
        %824 = vmatprep.subr.mxu0 %v402
        %825 = vmatpush1.msra.mxu0 %v401
        %826 = vmatprep.subr.mxu0 %v406
        %827 = vmatpush1.msra.mxu0 %v405
        %828 = vmatprep.subr.mxu0 %v410
        %829 = vmatpush1.msra.mxu0 %v409
        %830 = vmatprep.subr.mxu0 %v414
        %831 = vmatpush1.msra.mxu0 %v413
        %832 = vmatprep.subr.mxu0 %v418
        %833 = vmatpush1.msra.mxu0 %v417
        %834 = vmatprep.subr.mxu0 %v422
        %835 = vmatpush1.msra.mxu0 %v421
        %836 = vmatprep.subr.mxu0 %v426
        %837 = vmatpush1.msra.mxu0 %v425
        %838 = vmatprep.subr.mxu0 %v430
        %839 = vmatpush1.msra.mxu0 %v429
        %840 = vmatprep.subr.mxu0 %v434
        %841 = vmatpush1.msra.mxu0 %v433
        %842 = vmatprep.subr.mxu0 %v438
        %843 = vmatpush1.msra.mxu0 %v437
        %844 = vmatprep.subr.mxu0 %v442
        %845 = vmatpush1.msra.mxu0 %v441
        %846 = vmatprep.subr.mxu0 %v446
        %847 = vmatpush1.msra.mxu0 %v445
        %848 = vmatprep.subr.mxu0 %v450
        %849 = vmatpush1.msra.mxu0 %v449
        %850 = vmatprep.subr.mxu0 %v454
        %851 = vmatpush1.msra.mxu0 %v453
        %852 = vmatprep.subr.mxu0 %v458
        %853 = vmatpush1.msra.mxu0 %v457
        %854 = vmatprep.subr.mxu0 0.0
        %855 = vmatpush1.msra.mxu0 0.0
        %856 = vmatprep.subr.mxu0 0.0
        %857 = vmatpush1.msra.mxu0 0.0
        %858 = vmatprep.subr.mxu0 0.0
        %859 = vmatpush1.msra.mxu0 0.0
        %860 = vmatprep.subr.mxu0 0.0
        %861 = vmatpush1.msra.mxu0 0.0
        %862 = vmatprep.subr.mxu0 0.0
        %863 = vmatpush1.msra.mxu0 0.0
        %864 = vmatprep.subr.mxu0 0.0
        %865 = vmatpush1.msra.mxu0 0.0
        %866 = vmatprep.subr.mxu0 0.0
        %867 = vmatpush1.msra.mxu0 0.0
        %868 = vmatprep.subr.mxu0 0.0
        %869 = vmatpush1.msra.mxu0 0.0
        %870 = vmatprep.subr.mxu0 0.0
        %871 = vmatpush1.msra.mxu0 0.0
        %872 = vmatprep.subr.mxu0 0.0
        %873 = vmatpush1.msra.mxu0 0.0
        %874 = vmatprep.subr.mxu0 0.0
        %875 = vmatpush1.msra.mxu0 0.0
        %876 = vmatprep.subr.mxu0 0.0
        %877 = vmatpush1.msra.mxu0 0.0
        %878 = vmatprep.subr.mxu0 0.0
        %879 = vmatpush1.msra.mxu0 0.0
        %880 = vmatprep.subr.mxu0 0.0
        %881 = vmatpush1.msra.mxu0 0.0
        %882 = vmatprep.subr.mxu0 0.0
        %883 = vmatpush1.msra.mxu0 0.0
        %884 = vmatprep.subr.mxu0 0.0
        %885 = vmatpush1.msra.mxu0 0.0
        %886 = vmatprep.mubr.f32.mxu0 0.0
        %887 = vmatmul.mubr.f32.gmra.mrb[0].mxu0 0.0
        %v888 = vpop.f32.mrb[0].mxu0
        %v889 = vadd.f32 0.0, %v888
        %v890 = vpop.f32.mrb[0].mxu0
        %v891 = vadd.f32 0.0, %v890
        %892 = vdwg.mxu0
        %v893 = vadd.f32 %v747, %v818
        %v894 = vadd.f32 %v748, %v820
        %v895 = vadd.f32 %v749, %v889
        %v896 = vadd.f32 %v750, %v891
        %v897 = vxor.u32 %v893, 2147483648
        %v898 = vmul.f32 %v897, 1.442695
        %v899 = vpow.pop %v898
        %v900 = vadd.f32 %v899, 1.0
        %v901 = vrcp.pop %v900
        %v902 = vmul.f32 1.0, %v901
        %v903 = vxor.u32 %v894, 2147483648
        %v904 = vmul.f32 %v903, 1.442695
        %v905 = vpow.pop %v904
        %v906 = vadd.f32 %v905, 1.0
        %v907 = vrcp.pop %v906
        %v908 = vmul.f32 1.0, %v907
        %v909 = vtanh.pop %v895
        %v910 = vxor.u32 %v896, 2147483648
        %v911 = vmul.f32 %v910, 1.442695
        %v912 = vpow.pop %v911
        %v913 = vadd.f32 %v912, 1.0
        %v914 = vrcp.pop %v913
        %v915 = vmul.f32 1.0, %v914
        %v916 = vmul.f32 %v908, 0.0
        %v917 = vmul.f32 %v902, %v909
        %v918 = vadd.f32 %v916, %v917
        %v919 = vtanh.pop %v918
        %v920 = vmul.f32 %v915, %v919
        %921 = vst [vmem:[#allocation2] sm:$0xff] %v920
        %s922 = scalar_lea.vmem [#allocation3], 32
        %v923 = vld [vmem:[%s922] sm:$0xff]
        %v924 = vld [vmem:[%s922 + $0x8] sm:$0xff]
        %v925 = vld [vmem:[%s922 + $0x10] sm:$0xff]
        %v926 = vld [vmem:[%s922 + $0x18] sm:$0xff]
        %927 = vmatprep.subr.mxu0 %v396
        %928 = vmatpush1.msra.mxu0 %v395
        %929 = vmatprep.subr.mxu0 %v400
        %930 = vmatpush1.msra.mxu0 %v399
        %931 = vmatprep.subr.mxu0 %v404
        %932 = vmatpush1.msra.mxu0 %v403
        %933 = vmatprep.subr.mxu0 %v408
        %934 = vmatpush1.msra.mxu0 %v407
        %935 = vmatprep.subr.mxu0 %v412
        %936 = vmatpush1.msra.mxu0 %v411
        %937 = vmatprep.subr.mxu0 %v416
        %938 = vmatpush1.msra.mxu0 %v415
        %939 = vmatprep.subr.mxu0 %v420
        %940 = vmatpush1.msra.mxu0 %v419
        %941 = vmatprep.subr.mxu0 %v424
        %942 = vmatpush1.msra.mxu0 %v423
        %943 = vmatprep.subr.mxu0 %v428
        %944 = vmatpush1.msra.mxu0 %v427
        %945 = vmatprep.subr.mxu0 %v432
        %946 = vmatpush1.msra.mxu0 %v431
        %947 = vmatprep.subr.mxu0 %v436
        %948 = vmatpush1.msra.mxu0 %v435
        %949 = vmatprep.subr.mxu0 %v440
        %950 = vmatpush1.msra.mxu0 %v439
        %951 = vmatprep.subr.mxu0 %v444
        %952 = vmatpush1.msra.mxu0 %v443
        %953 = vmatprep.subr.mxu0 %v448
        %954 = vmatpush1.msra.mxu0 %v447
        %955 = vmatprep.subr.mxu0 %v452
        %956 = vmatpush1.msra.mxu0 %v451
        %957 = vmatprep.subr.mxu0 %v456
        %958 = vmatpush1.msra.mxu0 %v455
        %959 = vmatprep.subr.mxu0 0.0
        %960 = vmatpush1.msra.mxu0 0.0
        %961 = vmatprep.subr.mxu0 0.0
        %962 = vmatpush1.msra.mxu0 0.0
        %963 = vmatprep.subr.mxu0 0.0
        %964 = vmatpush1.msra.mxu0 0.0
        %965 = vmatprep.subr.mxu0 0.0
        %966 = vmatpush1.msra.mxu0 0.0
        %967 = vmatprep.subr.mxu0 0.0
        %968 = vmatpush1.msra.mxu0 0.0
        %969 = vmatprep.subr.mxu0 0.0
        %970 = vmatpush1.msra.mxu0 0.0
        %971 = vmatprep.subr.mxu0 0.0
        %972 = vmatpush1.msra.mxu0 0.0
        %973 = vmatprep.subr.mxu0 0.0
        %974 = vmatpush1.msra.mxu0 0.0
        %975 = vmatprep.subr.mxu0 0.0
        %976 = vmatpush1.msra.mxu0 0.0
        %977 = vmatprep.subr.mxu0 0.0
        %978 = vmatpush1.msra.mxu0 0.0
        %979 = vmatprep.subr.mxu0 0.0
        %980 = vmatpush1.msra.mxu0 0.0
        %981 = vmatprep.subr.mxu0 0.0
        %982 = vmatpush1.msra.mxu0 0.0
        %983 = vmatprep.subr.mxu0 0.0
        %984 = vmatpush1.msra.mxu0 0.0
        %985 = vmatprep.subr.mxu0 0.0
        %986 = vmatpush1.msra.mxu0 0.0
        %987 = vmatprep.subr.mxu0 0.0
        %988 = vmatpush1.msra.mxu0 0.0
        %989 = vmatprep.subr.mxu0 0.0
        %990 = vmatpush1.msra.mxu0 0.0
        %991 = vmatprep.mubr.f32.mxu0 0.0
        %992 = vmatmul.mubr.f32.gmra.mrb[0].mxu0 %v920
        %v993 = vpop.f32.mrb[0].mxu0
        %v994 = vadd.f32 0.0, %v993
        %v995 = vpop.f32.mrb[0].mxu0
        %v996 = vadd.f32 0.0, %v995
        %997 = vdwg.mxu0
        %998 = vmatprep.subr.mxu0 %v398
        %999 = vmatpush1.msra.mxu0 %v397
        %1000 = vmatprep.subr.mxu0 %v402
        %1001 = vmatpush1.msra.mxu0 %v401
        %1002 = vmatprep.subr.mxu0 %v406
        %1003 = vmatpush1.msra.mxu0 %v405
        %1004 = vmatprep.subr.mxu0 %v410
        %1005 = vmatpush1.msra.mxu0 %v409
        %1006 = vmatprep.subr.mxu0 %v414
        %1007 = vmatpush1.msra.mxu0 %v413
        %1008 = vmatprep.subr.mxu0 %v418
        %1009 = vmatpush1.msra.mxu0 %v417
        %1010 = vmatprep.subr.mxu0 %v422
        %1011 = vmatpush1.msra.mxu0 %v421
        %1012 = vmatprep.subr.mxu0 %v426
        %1013 = vmatpush1.msra.mxu0 %v425
        %1014 = vmatprep.subr.mxu0 %v430
        %1015 = vmatpush1.msra.mxu0 %v429
        %1016 = vmatprep.subr.mxu0 %v434
        %1017 = vmatpush1.msra.mxu0 %v433
        %1018 = vmatprep.subr.mxu0 %v438
        %1019 = vmatpush1.msra.mxu0 %v437
        %1020 = vmatprep.subr.mxu0 %v442
        %1021 = vmatpush1.msra.mxu0 %v441
        %1022 = vmatprep.subr.mxu0 %v446
        %1023 = vmatpush1.msra.mxu0 %v445
        %1024 = vmatprep.subr.mxu0 %v450
        %1025 = vmatpush1.msra.mxu0 %v449
        %1026 = vmatprep.subr.mxu0 %v454
        %1027 = vmatpush1.msra.mxu0 %v453
        %1028 = vmatprep.subr.mxu0 %v458
        %1029 = vmatpush1.msra.mxu0 %v457
        %1030 = vmatprep.subr.mxu0 0.0
        %1031 = vmatpush1.msra.mxu0 0.0
        %1032 = vmatprep.subr.mxu0 0.0
        %1033 = vmatpush1.msra.mxu0 0.0
        %1034 = vmatprep.subr.mxu0 0.0
        %1035 = vmatpush1.msra.mxu0 0.0
        %1036 = vmatprep.subr.mxu0 0.0
        %1037 = vmatpush1.msra.mxu0 0.0
        %1038 = vmatprep.subr.mxu0 0.0
        %1039 = vmatpush1.msra.mxu0 0.0
        %1040 = vmatprep.subr.mxu0 0.0
        %1041 = vmatpush1.msra.mxu0 0.0
        %1042 = vmatprep.subr.mxu0 0.0
        %1043 = vmatpush1.msra.mxu0 0.0
        %1044 = vmatprep.subr.mxu0 0.0
        %1045 = vmatpush1.msra.mxu0 0.0
        %1046 = vmatprep.subr.mxu0 0.0
        %1047 = vmatpush1.msra.mxu0 0.0
        %1048 = vmatprep.subr.mxu0 0.0
        %1049 = vmatpush1.msra.mxu0 0.0
        %1050 = vmatprep.subr.mxu0 0.0
        %1051 = vmatpush1.msra.mxu0 0.0
        %1052 = vmatprep.subr.mxu0 0.0
        %1053 = vmatpush1.msra.mxu0 0.0
        %1054 = vmatprep.subr.mxu0 0.0
        %1055 = vmatpush1.msra.mxu0 0.0
        %1056 = vmatprep.subr.mxu0 0.0
        %1057 = vmatpush1.msra.mxu0 0.0
        %1058 = vmatprep.subr.mxu0 0.0
        %1059 = vmatpush1.msra.mxu0 0.0
        %1060 = vmatprep.subr.mxu0 0.0
        %1061 = vmatpush1.msra.mxu0 0.0
        %1062 = vmatprep.mubr.f32.mxu0 0.0
        %1063 = vmatmul.mubr.f32.gmra.mrb[0].mxu0 %v920
        %v1064 = vpop.f32.mrb[0].mxu0
        %v1065 = vadd.f32 0.0, %v1064
        %v1066 = vpop.f32.mrb[0].mxu0
        %v1067 = vadd.f32 0.0, %v1066
        %1068 = vdwg.mxu0
        %v1069 = vadd.f32 %v923, %v994
        %v1070 = vadd.f32 %v924, %v996
        %v1071 = vadd.f32 %v925, %v1065
        %v1072 = vadd.f32 %v926, %v1067
        %v1073 = vxor.u32 %v1069, 2147483648
        %v1074 = vmul.f32 %v1073, 1.442695
        %v1075 = vpow.pop %v1074
        %v1076 = vadd.f32 %v1075, 1.0
        %v1077 = vrcp.pop %v1076
        %v1078 = vmul.f32 1.0, %v1077
        %v1079 = vxor.u32 %v1070, 2147483648
        %v1080 = vmul.f32 %v1079, 1.442695
        %v1081 = vpow.pop %v1080
        %v1082 = vadd.f32 %v1081, 1.0
        %v1083 = vrcp.pop %v1082
        %v1084 = vmul.f32 1.0, %v1083
        %v1085 = vtanh.pop %v1071
        %v1086 = vxor.u32 %v1072, 2147483648
        %v1087 = vmul.f32 %v1086, 1.442695
        %v1088 = vpow.pop %v1087
        %v1089 = vadd.f32 %v1088, 1.0
        %v1090 = vrcp.pop %v1089
        %v1091 = vmul.f32 1.0, %v1090
        %v1092 = vmul.f32 %v1084, %v918
        %v1093 = vmul.f32 %v1078, %v1085
        %v1094 = vadd.f32 %v1092, %v1093
        %v1095 = vtanh.pop %v1094
        %v1096 = vmul.f32 %v1091, %v1095
        %s1097 = scalar_lea.vmem [#allocation2], 8
        %1098 = vst [vmem:[%s1097] sm:$0xff] %v1096
        %s1099 = scalar_lea.vmem [#allocation3], 64
        %v1100 = vld [vmem:[%s1099] sm:$0xff]
        %v1101 = vld [vmem:[%s1099 + $0x8] sm:$0xff]
        %v1102 = vld [vmem:[%s1099 + $0x10] sm:$0xff]
        %v1103 = vld [vmem:[%s1099 + $0x18] sm:$0xff]
        %1104 = vmatprep.subr.mxu0 %v396
        %1105 = vmatpush1.msra.mxu0 %v395
        %1106 = vmatprep.subr.mxu0 %v400
        %1107 = vmatpush1.msra.mxu0 %v399
        %1108 = vmatprep.subr.mxu0 %v404
        %1109 = vmatpush1.msra.mxu0 %v403
        %1110 = vmatprep.subr.mxu0 %v408
        %1111 = vmatpush1.msra.mxu0 %v407
        %1112 = vmatprep.subr.mxu0 %v412
        %1113 = vmatpush1.msra.mxu0 %v411
        %1114 = vmatprep.subr.mxu0 %v416
        %1115 = vmatpush1.msra.mxu0 %v415
        %1116 = vmatprep.subr.mxu0 %v420
        %1117 = vmatpush1.msra.mxu0 %v419
        %1118 = vmatprep.subr.mxu0 %v424
        %1119 = vmatpush1.msra.mxu0 %v423
        %1120 = vmatprep.subr.mxu0 %v428
        %1121 = vmatpush1.msra.mxu0 %v427
        %1122 = vmatprep.subr.mxu0 %v432
        %1123 = vmatpush1.msra.mxu0 %v431
        %1124 = vmatprep.subr.mxu0 %v436
        %1125 = vmatpush1.msra.mxu0 %v435
        %1126 = vmatprep.subr.mxu0 %v440
        %1127 = vmatpush1.msra.mxu0 %v439
        %1128 = vmatprep.subr.mxu0 %v444
        %1129 = vmatpush1.msra.mxu0 %v443
        %1130 = vmatprep.subr.mxu0 %v448
        %1131 = vmatpush1.msra.mxu0 %v447
        %1132 = vmatprep.subr.mxu0 %v452
        %1133 = vmatpush1.msra.mxu0 %v451
        %1134 = vmatprep.subr.mxu0 %v456
        %1135 = vmatpush1.msra.mxu0 %v455
        %1136 = vmatprep.subr.mxu0 0.0
        %1137 = vmatpush1.msra.mxu0 0.0
        %1138 = vmatprep.subr.mxu0 0.0
        %1139 = vmatpush1.msra.mxu0 0.0
        %1140 = vmatprep.subr.mxu0 0.0
        %1141 = vmatpush1.msra.mxu0 0.0
        %1142 = vmatprep.subr.mxu0 0.0
        %1143 = vmatpush1.msra.mxu0 0.0
        %1144 = vmatprep.subr.mxu0 0.0
        %1145 = vmatpush1.msra.mxu0 0.0
        %1146 = vmatprep.subr.mxu0 0.0
        %1147 = vmatpush1.msra.mxu0 0.0
        %1148 = vmatprep.subr.mxu0 0.0
        %1149 = vmatpush1.msra.mxu0 0.0
        %1150 = vmatprep.subr.mxu0 0.0
        %1151 = vmatpush1.msra.mxu0 0.0
        %1152 = vmatprep.subr.mxu0 0.0
        %1153 = vmatpush1.msra.mxu0 0.0
        %1154 = vmatprep.subr.mxu0 0.0
        %1155 = vmatpush1.msra.mxu0 0.0
        %1156 = vmatprep.subr.mxu0 0.0
        %1157 = vmatpush1.msra.mxu0 0.0
        %1158 = vmatprep.subr.mxu0 0.0
        %1159 = vmatpush1.msra.mxu0 0.0
        %1160 = vmatprep.subr.mxu0 0.0
        %1161 = vmatpush1.msra.mxu0 0.0
        %1162 = vmatprep.subr.mxu0 0.0
        %1163 = vmatpush1.msra.mxu0 0.0
        %1164 = vmatprep.subr.mxu0 0.0
        %1165 = vmatpush1.msra.mxu0 0.0
        %1166 = vmatprep.subr.mxu0 0.0
        %1167 = vmatpush1.msra.mxu0 0.0
        %1168 = vmatprep.mubr.f32.mxu0 0.0
        %1169 = vmatmul.mubr.f32.gmra.mrb[0].mxu0 %v1096
        %v1170 = vpop.f32.mrb[0].mxu0
        %v1171 = vadd.f32 0.0, %v1170
        %v1172 = vpop.f32.mrb[0].mxu0
        %v1173 = vadd.f32 0.0, %v1172
        %1174 = vdwg.mxu0
        %1175 = vmatprep.subr.mxu0 %v398
        %1176 = vmatpush1.msra.mxu0 %v397
        %1177 = vmatprep.subr.mxu0 %v402
        %1178 = vmatpush1.msra.mxu0 %v401
        %1179 = vmatprep.subr.mxu0 %v406
        %1180 = vmatpush1.msra.mxu0 %v405
        %1181 = vmatprep.subr.mxu0 %v410
        %1182 = vmatpush1.msra.mxu0 %v409
        %1183 = vmatprep.subr.mxu0 %v414
        %1184 = vmatpush1.msra.mxu0 %v413
        %1185 = vmatprep.subr.mxu0 %v418
        %1186 = vmatpush1.msra.mxu0 %v417
        %1187 = vmatprep.subr.mxu0 %v422
        %1188 = vmatpush1.msra.mxu0 %v421
        %1189 = vmatprep.subr.mxu0 %v426
        %1190 = vmatpush1.msra.mxu0 %v425
        %1191 = vmatprep.subr.mxu0 %v430
        %1192 = vmatpush1.msra.mxu0 %v429
        %1193 = vmatprep.subr.mxu0 %v434
        %1194 = vmatpush1.msra.mxu0 %v433
        %1195 = vmatprep.subr.mxu0 %v438
        %1196 = vmatpush1.msra.mxu0 %v437
        %1197 = vmatprep.subr.mxu0 %v442
        %1198 = vmatpush1.msra.mxu0 %v441
        %1199 = vmatprep.subr.mxu0 %v446
        %1200 = vmatpush1.msra.mxu0 %v445
        %1201 = vmatprep.subr.mxu0 %v450
        %1202 = vmatpush1.msra.mxu0 %v449
        %1203 = vmatprep.subr.mxu0 %v454
        %1204 = vmatpush1.msra.mxu0 %v453
        %1205 = vmatprep.subr.mxu0 %v458
        %1206 = vmatpush1.msra.mxu0 %v457
        %1207 = vmatprep.subr.mxu0 0.0
        %1208 = vmatpush1.msra.mxu0 0.0
        %1209 = vmatprep.subr.mxu0 0.0
        %1210 = vmatpush1.msra.mxu0 0.0
        %1211 = vmatprep.subr.mxu0 0.0
        %1212 = vmatpush1.msra.mxu0 0.0
        %1213 = vmatprep.subr.mxu0 0.0
        %1214 = vmatpush1.msra.mxu0 0.0
        %1215 = vmatprep.subr.mxu0 0.0
        %1216 = vmatpush1.msra.mxu0 0.0
        %1217 = vmatprep.subr.mxu0 0.0
        %1218 = vmatpush1.msra.mxu0 0.0
        %1219 = vmatprep.subr.mxu0 0.0
        %1220 = vmatpush1.msra.mxu0 0.0
        %1221 = vmatprep.subr.mxu0 0.0
        %1222 = vmatpush1.msra.mxu0 0.0
        %1223 = vmatprep.subr.mxu0 0.0
        %1224 = vmatpush1.msra.mxu0 0.0
        %1225 = vmatprep.subr.mxu0 0.0
        %1226 = vmatpush1.msra.mxu0 0.0
        %1227 = vmatprep.subr.mxu0 0.0
        %1228 = vmatpush1.msra.mxu0 0.0
        %1229 = vmatprep.subr.mxu0 0.0
        %1230 = vmatpush1.msra.mxu0 0.0
        %1231 = vmatprep.subr.mxu0 0.0
        %1232 = vmatpush1.msra.mxu0 0.0
        %1233 = vmatprep.subr.mxu0 0.0
        %1234 = vmatpush1.msra.mxu0 0.0
        %1235 = vmatprep.subr.mxu0 0.0
        %1236 = vmatpush1.msra.mxu0 0.0
        %1237 = vmatprep.subr.mxu0 0.0
        %1238 = vmatpush1.msra.mxu0 0.0
        %1239 = vmatprep.mubr.f32.mxu0 0.0
        %1240 = vmatmul.mubr.f32.gmra.mrb[0].mxu0 %v1096
        %v1241 = vpop.f32.mrb[0].mxu0
        %v1242 = vadd.f32 0.0, %v1241
        %v1243 = vpop.f32.mrb[0].mxu0
        %v1244 = vadd.f32 0.0, %v1243
        %1245 = vdwg.mxu0
        %v1246 = vadd.f32 %v1100, %v1171
        %v1247 = vadd.f32 %v1101, %v1173
        %v1248 = vadd.f32 %v1102, %v1242
        %v1249 = vadd.f32 %v1103, %v1244
        %v1250 = vxor.u32 %v1246, 2147483648
        %v1251 = vmul.f32 %v1250, 1.442695
        %v1252 = vpow.pop %v1251
        %v1253 = vadd.f32 %v1252, 1.0
        %v1254 = vrcp.pop %v1253
        %v1255 = vmul.f32 1.0, %v1254
        %v1256 = vxor.u32 %v1247, 2147483648
        %v1257 = vmul.f32 %v1256, 1.442695
        %v1258 = vpow.pop %v1257
        %v1259 = vadd.f32 %v1258, 1.0
        %v1260 = vrcp.pop %v1259
        %v1261 = vmul.f32 1.0, %v1260
        %v1262 = vtanh.pop %v1248
        %v1263 = vxor.u32 %v1249, 2147483648
        %v1264 = vmul.f32 %v1263, 1.442695
        %v1265 = vpow.pop %v1264
        %v1266 = vadd.f32 %v1265, 1.0
        %v1267 = vrcp.pop %v1266
        %v1268 = vmul.f32 1.0, %v1267
        %v1269 = vmul.f32 %v1261, %v1094
        %v1270 = vmul.f32 %v1255, %v1262
        %v1271 = vadd.f32 %v1269, %v1270
        %v1272 = vtanh.pop %v1271
        %v1273 = vmul.f32 %v1268, %v1272
        %s1274 = scalar_lea.vmem [#allocation2], 16
        %1275 = vst [vmem:[%s1274] sm:$0xff] %v1273
        %s1276 = scalar_lea.vmem [#allocation3], 96
        %v1277 = vld [vmem:[%s1276] sm:$0xff]
        %v1278 = vld [vmem:[%s1276 + $0x8] sm:$0xff]
        %v1279 = vld [vmem:[%s1276 + $0x10] sm:$0xff]
        %v1280 = vld [vmem:[%s1276 + $0x18] sm:$0xff]
        %1281 = vmatprep.subr.mxu0 %v396
        %1282 = vmatpush1.msra.mxu0 %v395
        %1283 = vmatprep.subr.mxu0 %v400
        %1284 = vmatpush1.msra.mxu0 %v399
        %1285 = vmatprep.subr.mxu0 %v404
        %1286 = vmatpush1.msra.mxu0 %v403
        %1287 = vmatprep.subr.mxu0 %v408
        %1288 = vmatpush1.msra.mxu0 %v407
        %1289 = vmatprep.subr.mxu0 %v412
        %1290 = vmatpush1.msra.mxu0 %v411
        %1291 = vmatprep.subr.mxu0 %v416
        %1292 = vmatpush1.msra.mxu0 %v415
        %1293 = vmatprep.subr.mxu0 %v420
        %1294 = vmatpush1.msra.mxu0 %v419
        %1295 = vmatprep.subr.mxu0 %v424
        %1296 = vmatpush1.msra.mxu0 %v423
        %1297 = vmatprep.subr.mxu0 %v428
        %1298 = vmatpush1.msra.mxu0 %v427
        %1299 = vmatprep.subr.mxu0 %v432
        %1300 = vmatpush1.msra.mxu0 %v431
        %1301 = vmatprep.subr.mxu0 %v436
        %1302 = vmatpush1.msra.mxu0 %v435
        %1303 = vmatprep.subr.mxu0 %v440
        %1304 = vmatpush1.msra.mxu0 %v439
        %1305 = vmatprep.subr.mxu0 %v444
        %1306 = vmatpush1.msra.mxu0 %v443
        %1307 = vmatprep.subr.mxu0 %v448
        %1308 = vmatpush1.msra.mxu0 %v447
        %1309 = vmatprep.subr.mxu0 %v452
        %1310 = vmatpush1.msra.mxu0 %v451
        %1311 = vmatprep.subr.mxu0 %v456
        %1312 = vmatpush1.msra.mxu0 %v455
        %1313 = vmatprep.subr.mxu0 0.0
        %1314 = vmatpush1.msra.mxu0 0.0
        %1315 = vmatprep.subr.mxu0 0.0
        %1316 = vmatpush1.msra.mxu0 0.0
        %1317 = vmatprep.subr.mxu0 0.0
        %1318 = vmatpush1.msra.mxu0 0.0
        %1319 = vmatprep.subr.mxu0 0.0
        %1320 = vmatpush1.msra.mxu0 0.0
        %1321 = vmatprep.subr.mxu0 0.0
        %1322 = vmatpush1.msra.mxu0 0.0
        %1323 = vmatprep.subr.mxu0 0.0
        %1324 = vmatpush1.msra.mxu0 0.0
        %1325 = vmatprep.subr.mxu0 0.0
        %1326 = vmatpush1.msra.mxu0 0.0
        %1327 = vmatprep.subr.mxu0 0.0
        %1328 = vmatpush1.msra.mxu0 0.0
        %1329 = vmatprep.subr.mxu0 0.0
        %1330 = vmatpush1.msra.mxu0 0.0
        %1331 = vmatprep.subr.mxu0 0.0
        %1332 = vmatpush1.msra.mxu0 0.0
        %1333 = vmatprep.subr.mxu0 0.0
        %1334 = vmatpush1.msra.mxu0 0.0
        %1335 = vmatprep.subr.mxu0 0.0
        %1336 = vmatpush1.msra.mxu0 0.0
        %1337 = vmatprep.subr.mxu0 0.0
        %1338 = vmatpush1.msra.mxu0 0.0
        %1339 = vmatprep.subr.mxu0 0.0
        %1340 = vmatpush1.msra.mxu0 0.0
        %1341 = vmatprep.subr.mxu0 0.0
        %1342 = vmatpush1.msra.mxu0 0.0
        %1343 = vmatprep.subr.mxu0 0.0
        %1344 = vmatpush1.msra.mxu0 0.0
        %1345 = vmatprep.mubr.f32.mxu0 0.0
        %1346 = vmatmul.mubr.f32.gmra.mrb[0].mxu0 %v1273
        %v1347 = vpop.f32.mrb[0].mxu0
        %v1348 = vadd.f32 0.0, %v1347
        %v1349 = vpop.f32.mrb[0].mxu0
        %v1350 = vadd.f32 0.0, %v1349
        %1351 = vdwg.mxu0
        %1352 = vmatprep.subr.mxu0 %v398
        %1353 = vmatpush1.msra.mxu0 %v397
        %1354 = vmatprep.subr.mxu0 %v402
        %1355 = vmatpush1.msra.mxu0 %v401
        %1356 = vmatprep.subr.mxu0 %v406
        %1357 = vmatpush1.msra.mxu0 %v405
        %1358 = vmatprep.subr.mxu0 %v410
        %1359 = vmatpush1.msra.mxu0 %v409
        %1360 = vmatprep.subr.mxu0 %v414
        %1361 = vmatpush1.msra.mxu0 %v413
        %1362 = vmatprep.subr.mxu0 %v418
        %1363 = vmatpush1.msra.mxu0 %v417
        %1364 = vmatprep.subr.mxu0 %v422
        %1365 = vmatpush1.msra.mxu0 %v421
        %1366 = vmatprep.subr.mxu0 %v426
        %1367 = vmatpush1.msra.mxu0 %v425
        %1368 = vmatprep.subr.mxu0 %v430
        %1369 = vmatpush1.msra.mxu0 %v429
        %1370 = vmatprep.subr.mxu0 %v434
        %1371 = vmatpush1.msra.mxu0 %v433
        %1372 = vmatprep.subr.mxu0 %v438
        %1373 = vmatpush1.msra.mxu0 %v437
        %1374 = vmatprep.subr.mxu0 %v442
        %1375 = vmatpush1.msra.mxu0 %v441
        %1376 = vmatprep.subr.mxu0 %v446
        %1377 = vmatpush1.msra.mxu0 %v445
        %1378 = vmatprep.subr.mxu0 %v450
        %1379 = vmatpush1.msra.mxu0 %v449
        %1380 = vmatprep.subr.mxu0 %v454
        %1381 = vmatpush1.msra.mxu0 %v453
        %1382 = vmatprep.subr.mxu0 %v458
        %1383 = vmatpush1.msra.mxu0 %v457
        %1384 = vmatprep.subr.mxu0 0.0
        %1385 = vmatpush1.msra.mxu0 0.0
        %1386 = vmatprep.subr.mxu0 0.0
        %1387 = vmatpush1.msra.mxu0 0.0
        %1388 = vmatprep.subr.mxu0 0.0
        %1389 = vmatpush1.msra.mxu0 0.0
        %1390 = vmatprep.subr.mxu0 0.0
        %1391 = vmatpush1.msra.mxu0 0.0
        %1392 = vmatprep.subr.mxu0 0.0
        %1393 = vmatpush1.msra.mxu0 0.0
        %1394 = vmatprep.subr.mxu0 0.0
        %1395 = vmatpush1.msra.mxu0 0.0
        %1396 = vmatprep.subr.mxu0 0.0
        %1397 = vmatpush1.msra.mxu0 0.0
        %1398 = vmatprep.subr.mxu0 0.0
        %1399 = vmatpush1.msra.mxu0 0.0
        %1400 = vmatprep.subr.mxu0 0.0
        %1401 = vmatpush1.msra.mxu0 0.0
        %1402 = vmatprep.subr.mxu0 0.0
        %1403 = vmatpush1.msra.mxu0 0.0
        %1404 = vmatprep.subr.mxu0 0.0
        %1405 = vmatpush1.msra.mxu0 0.0
        %1406 = vmatprep.subr.mxu0 0.0
        %1407 = vmatpush1.msra.mxu0 0.0
        %1408 = vmatprep.subr.mxu0 0.0
        %1409 = vmatpush1.msra.mxu0 0.0
        %1410 = vmatprep.subr.mxu0 0.0
        %1411 = vmatpush1.msra.mxu0 0.0
        %1412 = vmatprep.subr.mxu0 0.0
        %1413 = vmatpush1.msra.mxu0 0.0
        %1414 = vmatprep.subr.mxu0 0.0
        %1415 = vmatpush1.msra.mxu0 0.0
        %1416 = vmatprep.mubr.f32.mxu0 0.0
        %1417 = vmatmul.mubr.f32.gmra.mrb[0].mxu0 %v1273
        %v1418 = vpop.f32.mrb[0].mxu0
        %v1419 = vadd.f32 0.0, %v1418
        %v1420 = vpop.f32.mrb[0].mxu0
        %v1421 = vadd.f32 0.0, %v1420
        %1422 = vdwg.mxu0
        %v1423 = vadd.f32 %v1277, %v1348
        %v1424 = vadd.f32 %v1278, %v1350
        %v1425 = vadd.f32 %v1279, %v1419
        %v1426 = vadd.f32 %v1280, %v1421
        %v1427 = vxor.u32 %v1423, 2147483648
        %v1428 = vmul.f32 %v1427, 1.442695
        %v1429 = vpow.pop %v1428
        %v1430 = vadd.f32 %v1429, 1.0
        %v1431 = vrcp.pop %v1430
        %v1432 = vmul.f32 1.0, %v1431
        %v1433 = vxor.u32 %v1424, 2147483648
        %v1434 = vmul.f32 %v1433, 1.442695
        %v1435 = vpow.pop %v1434
        %v1436 = vadd.f32 %v1435, 1.0
        %v1437 = vrcp.pop %v1436
        %v1438 = vmul.f32 1.0, %v1437
        %v1439 = vtanh.pop %v1425
        %v1440 = vxor.u32 %v1426, 2147483648
        %v1441 = vmul.f32 %v1440, 1.442695
        %v1442 = vpow.pop %v1441
        %v1443 = vadd.f32 %v1442, 1.0
        %v1444 = vrcp.pop %v1443
        %v1445 = vmul.f32 1.0, %v1444
        %v1446 = vmul.f32 %v1438, %v1271
        %v1447 = vmul.f32 %v1432, %v1439
        %v1448 = vadd.f32 %v1446, %v1447
        %v1449 = vtanh.pop %v1448
        %v1450 = vmul.f32 %v1445, %v1449
        %s1451 = scalar_lea.vmem [#allocation2], 24
        %1452 = vst [vmem:[%s1451] sm:$0xff] %v1450
        %s1453 = scalar_lea.vmem [#allocation3], 128
        %v1454 = vld [vmem:[%s1453] sm:$0xff]
        %v1455 = vld [vmem:[%s1453 + $0x8] sm:$0xff]
        %v1456 = vld [vmem:[%s1453 + $0x10] sm:$0xff]
        %v1457 = vld [vmem:[%s1453 + $0x18] sm:$0xff]
        %1458 = vmatprep.subr.mxu0 %v396
        %1459 = vmatpush1.msra.mxu0 %v395
        %1460 = vmatprep.subr.mxu0 %v400
        %1461 = vmatpush1.msra.mxu0 %v399
        %1462 = vmatprep.subr.mxu0 %v404
        %1463 = vmatpush1.msra.mxu0 %v403
        %1464 = vmatprep.subr.mxu0 %v408
        %1465 = vmatpush1.msra.mxu0 %v407
        %1466 = vmatprep.subr.mxu0 %v412
        %1467 = vmatpush1.msra.mxu0 %v411
        %1468 = vmatprep.subr.mxu0 %v416
        %1469 = vmatpush1.msra.mxu0 %v415
        %1470 = vmatprep.subr.mxu0 %v420
        %1471 = vmatpush1.msra.mxu0 %v419
        %1472 = vmatprep.subr.mxu0 %v424
        %1473 = vmatpush1.msra.mxu0 %v423
        %1474 = vmatprep.subr.mxu0 %v428
        %1475 = vmatpush1.msra.mxu0 %v427
        %1476 = vmatprep.subr.mxu0 %v432
        %1477 = vmatpush1.msra.mxu0 %v431
        %1478 = vmatprep.subr.mxu0 %v436
        %1479 = vmatpush1.msra.mxu0 %v435
        %1480 = vmatprep.subr.mxu0 %v440
        %1481 = vmatpush1.msra.mxu0 %v439
        %1482 = vmatprep.subr.mxu0 %v444
        %1483 = vmatpush1.msra.mxu0 %v443
        %1484 = vmatprep.subr.mxu0 %v448
        %1485 = vmatpush1.msra.mxu0 %v447
        %1486 = vmatprep.subr.mxu0 %v452
        %1487 = vmatpush1.msra.mxu0 %v451
        %1488 = vmatprep.subr.mxu0 %v456
        %1489 = vmatpush1.msra.mxu0 %v455
        %1490 = vmatprep.subr.mxu0 0.0
        %1491 = vmatpush1.msra.mxu0 0.0
        %1492 = vmatprep.subr.mxu0 0.0
        %1493 = vmatpush1.msra.mxu0 0.0
        %1494 = vmatprep.subr.mxu0 0.0
        %1495 = vmatpush1.msra.mxu0 0.0
        %1496 = vmatprep.subr.mxu0 0.0
        %1497 = vmatpush1.msra.mxu0 0.0
        %1498 = vmatprep.subr.mxu0 0.0
        %1499 = vmatpush1.msra.mxu0 0.0
        %1500 = vmatprep.subr.mxu0 0.0
        %1501 = vmatpush1.msra.mxu0 0.0
        %1502 = vmatprep.subr.mxu0 0.0
        %1503 = vmatpush1.msra.mxu0 0.0
        %1504 = vmatprep.subr.mxu0 0.0
        %1505 = vmatpush1.msra.mxu0 0.0
        %1506 = vmatprep.subr.mxu0 0.0
        %1507 = vmatpush1.msra.mxu0 0.0
        %1508 = vmatprep.subr.mxu0 0.0
        %1509 = vmatpush1.msra.mxu0 0.0
        %1510 = vmatprep.subr.mxu0 0.0
        %1511 = vmatpush1.msra.mxu0 0.0
        %1512 = vmatprep.subr.mxu0 0.0
        %1513 = vmatpush1.msra.mxu0 0.0
        %1514 = vmatprep.subr.mxu0 0.0
        %1515 = vmatpush1.msra.mxu0 0.0
        %1516 = vmatprep.subr.mxu0 0.0
        %1517 = vmatpush1.msra.mxu0 0.0
        %1518 = vmatprep.subr.mxu0 0.0
        %1519 = vmatpush1.msra.mxu0 0.0
        %1520 = vmatprep.subr.mxu0 0.0
        %1521 = vmatpush1.msra.mxu0 0.0
        %1522 = vmatprep.mubr.f32.mxu0 0.0
        %1523 = vmatmul.mubr.f32.gmra.mrb[0].mxu0 %v1450
        %v1524 = vpop.f32.mrb[0].mxu0
        %v1525 = vadd.f32 0.0, %v1524
        %v1526 = vpop.f32.mrb[0].mxu0
        %v1527 = vadd.f32 0.0, %v1526
        %1528 = vdwg.mxu0
        %1529 = vmatprep.subr.mxu0 %v398
        %1530 = vmatpush1.msra.mxu0 %v397
        %1531 = vmatprep.subr.mxu0 %v402
        %1532 = vmatpush1.msra.mxu0 %v401
        %1533 = vmatprep.subr.mxu0 %v406
        %1534 = vmatpush1.msra.mxu0 %v405
        %1535 = vmatprep.subr.mxu0 %v410
        %1536 = vmatpush1.msra.mxu0 %v409
        %1537 = vmatprep.subr.mxu0 %v414
        %1538 = vmatpush1.msra.mxu0 %v413
        %1539 = vmatprep.subr.mxu0 %v418
        %1540 = vmatpush1.msra.mxu0 %v417
        %1541 = vmatprep.subr.mxu0 %v422
        %1542 = vmatpush1.msra.mxu0 %v421
        %1543 = vmatprep.subr.mxu0 %v426
        %1544 = vmatpush1.msra.mxu0 %v425
        %1545 = vmatprep.subr.mxu0 %v430
        %1546 = vmatpush1.msra.mxu0 %v429
        %1547 = vmatprep.subr.mxu0 %v434
        %1548 = vmatpush1.msra.mxu0 %v433
        %1549 = vmatprep.subr.mxu0 %v438
        %1550 = vmatpush1.msra.mxu0 %v437
        %1551 = vmatprep.subr.mxu0 %v442
        %1552 = vmatpush1.msra.mxu0 %v441
        %1553 = vmatprep.subr.mxu0 %v446
        %1554 = vmatpush1.msra.mxu0 %v445
        %1555 = vmatprep.subr.mxu0 %v450
        %1556 = vmatpush1.msra.mxu0 %v449
        %1557 = vmatprep.subr.mxu0 %v454
        %1558 = vmatpush1.msra.mxu0 %v453
        %1559 = vmatprep.subr.mxu0 %v458
        %1560 = vmatpush1.msra.mxu0 %v457
        %1561 = vmatprep.subr.mxu0 0.0
        %1562 = vmatpush1.msra.mxu0 0.0
        %1563 = vmatprep.subr.mxu0 0.0
        %1564 = vmatpush1.msra.mxu0 0.0
        %1565 = vmatprep.subr.mxu0 0.0
        %1566 = vmatpush1.msra.mxu0 0.0
        %1567 = vmatprep.subr.mxu0 0.0
        %1568 = vmatpush1.msra.mxu0 0.0
        %1569 = vmatprep.subr.mxu0 0.0
        %1570 = vmatpush1.msra.mxu0 0.0
        %1571 = vmatprep.subr.mxu0 0.0
        %1572 = vmatpush1.msra.mxu0 0.0
        %1573 = vmatprep.subr.mxu0 0.0
        %1574 = vmatpush1.msra.mxu0 0.0
        %1575 = vmatprep.subr.mxu0 0.0
        %1576 = vmatpush1.msra.mxu0 0.0
        %1577 = vmatprep.subr.mxu0 0.0
        %1578 = vmatpush1.msra.mxu0 0.0
        %1579 = vmatprep.subr.mxu0 0.0
        %1580 = vmatpush1.msra.mxu0 0.0
        %1581 = vmatprep.subr.mxu0 0.0
        %1582 = vmatpush1.msra.mxu0 0.0
        %1583 = vmatprep.subr.mxu0 0.0
        %1584 = vmatpush1.msra.mxu0 0.0
        %1585 = vmatprep.subr.mxu0 0.0
        %1586 = vmatpush1.msra.mxu0 0.0
        %1587 = vmatprep.subr.mxu0 0.0
        %1588 = vmatpush1.msra.mxu0 0.0
        %1589 = vmatprep.subr.mxu0 0.0
        %1590 = vmatpush1.msra.mxu0 0.0
        %1591 = vmatprep.subr.mxu0 0.0
        %1592 = vmatpush1.msra.mxu0 0.0
        %1593 = vmatprep.mubr.f32.mxu0 0.0
        %1594 = vmatmul.mubr.f32.gmra.mrb[0].mxu0 %v1450
        %v1595 = vpop.f32.mrb[0].mxu0
        %v1596 = vadd.f32 0.0, %v1595
        %v1597 = vpop.f32.mrb[0].mxu0
        %v1598 = vadd.f32 0.0, %v1597
        %1599 = vdwg.mxu0
        %v1600 = vadd.f32 %v1454, %v1525
        %v1601 = vadd.f32 %v1455, %v1527
        %v1602 = vadd.f32 %v1456, %v1596
        %v1603 = vadd.f32 %v1457, %v1598
        %v1604 = vxor.u32 %v1600, 2147483648
        %v1605 = vmul.f32 %v1604, 1.442695
        %v1606 = vpow.pop %v1605
        %v1607 = vadd.f32 %v1606, 1.0
        %v1608 = vrcp.pop %v1607
        %v1609 = vmul.f32 1.0, %v1608
        %v1610 = vxor.u32 %v1601, 2147483648
        %v1611 = vmul.f32 %v1610, 1.442695
        %v1612 = vpow.pop %v1611
        %v1613 = vadd.f32 %v1612, 1.0
        %v1614 = vrcp.pop %v1613
        %v1615 = vmul.f32 1.0, %v1614
        %v1616 = vtanh.pop %v1602
        %v1617 = vxor.u32 %v1603, 2147483648
        %v1618 = vmul.f32 %v1617, 1.442695
        %v1619 = vpow.pop %v1618
        %v1620 = vadd.f32 %v1619, 1.0
        %v1621 = vrcp.pop %v1620
        %v1622 = vmul.f32 1.0, %v1621
        %v1623 = vmul.f32 %v1615, %v1448
        %v1624 = vmul.f32 %v1609, %v1616
        %v1625 = vadd.f32 %v1623, %v1624
        %v1626 = vtanh.pop %v1625
        %v1627 = vmul.f32 %v1622, %v1626
        %s1628 = scalar_lea.vmem [#allocation2], 32
        %1629 = vst [vmem:[%s1628] sm:$0xff] %v1627
        %s1630 = scalar_lea.vmem [#allocation3], 160
        %v1631 = vld [vmem:[%s1630] sm:$0xff]
        %v1632 = vld [vmem:[%s1630 + $0x8] sm:$0xff]
        %v1633 = vld [vmem:[%s1630 + $0x10] sm:$0xff]
        %v1634 = vld [vmem:[%s1630 + $0x18] sm:$0xff]
        %1635 = vmatprep.subr.mxu0 %v396
        %1636 = vmatpush1.msra.mxu0 %v395
        %1637 = vmatprep.subr.mxu0 %v400
        %1638 = vmatpush1.msra.mxu0 %v399
        %1639 = vmatprep.subr.mxu0 %v404
        %1640 = vmatpush1.msra.mxu0 %v403
        %1641 = vmatprep.subr.mxu0 %v408
        %1642 = vmatpush1.msra.mxu0 %v407
        %1643 = vmatprep.subr.mxu0 %v412
        %1644 = vmatpush1.msra.mxu0 %v411
        %1645 = vmatprep.subr.mxu0 %v416
        %1646 = vmatpush1.msra.mxu0 %v415
        %1647 = vmatprep.subr.mxu0 %v420
        %1648 = vmatpush1.msra.mxu0 %v419
        %1649 = vmatprep.subr.mxu0 %v424
        %1650 = vmatpush1.msra.mxu0 %v423
        %1651 = vmatprep.subr.mxu0 %v428
        %1652 = vmatpush1.msra.mxu0 %v427
        %1653 = vmatprep.subr.mxu0 %v432
        %1654 = vmatpush1.msra.mxu0 %v431
        %1655 = vmatprep.subr.mxu0 %v436
        %1656 = vmatpush1.msra.mxu0 %v435
        %1657 = vmatprep.subr.mxu0 %v440
        %1658 = vmatpush1.msra.mxu0 %v439
        %1659 = vmatprep.subr.mxu0 %v444
        %1660 = vmatpush1.msra.mxu0 %v443
        %1661 = vmatprep.subr.mxu0 %v448
        %1662 = vmatpush1.msra.mxu0 %v447
        %1663 = vmatprep.subr.mxu0 %v452
        %1664 = vmatpush1.msra.mxu0 %v451
        %1665 = vmatprep.subr.mxu0 %v456
        %1666 = vmatpush1.msra.mxu0 %v455
        %1667 = vmatprep.subr.mxu0 0.0
        %1668 = vmatpush1.msra.mxu0 0.0
        %1669 = vmatprep.subr.mxu0 0.0
        %1670 = vmatpush1.msra.mxu0 0.0
        %1671 = vmatprep.subr.mxu0 0.0
        %1672 = vmatpush1.msra.mxu0 0.0
        %1673 = vmatprep.subr.mxu0 0.0
        %1674 = vmatpush1.msra.mxu0 0.0
        %1675 = vmatprep.subr.mxu0 0.0
        %1676 = vmatpush1.msra.mxu0 0.0
        %1677 = vmatprep.subr.mxu0 0.0
        %1678 = vmatpush1.msra.mxu0 0.0
        %1679 = vmatprep.subr.mxu0 0.0
        %1680 = vmatpush1.msra.mxu0 0.0
        %1681 = vmatprep.subr.mxu0 0.0
        %1682 = vmatpush1.msra.mxu0 0.0
        %1683 = vmatprep.subr.mxu0 0.0
        %1684 = vmatpush1.msra.mxu0 0.0
        %1685 = vmatprep.subr.mxu0 0.0
        %1686 = vmatpush1.msra.mxu0 0.0
        %1687 = vmatprep.subr.mxu0 0.0
        %1688 = vmatpush1.msra.mxu0 0.0
        %1689 = vmatprep.subr.mxu0 0.0
        %1690 = vmatpush1.msra.mxu0 0.0
        %1691 = vmatprep.subr.mxu0 0.0
        %1692 = vmatpush1.msra.mxu0 0.0
        %1693 = vmatprep.subr.mxu0 0.0
        %1694 = vmatpush1.msra.mxu0 0.0
        %1695 = vmatprep.subr.mxu0 0.0
        %1696 = vmatpush1.msra.mxu0 0.0
        %1697 = vmatprep.subr.mxu0 0.0
        %1698 = vmatpush1.msra.mxu0 0.0
        %1699 = vmatprep.mubr.f32.mxu0 0.0
        %1700 = vmatmul.mubr.f32.gmra.mrb[0].mxu0 %v1627
        %v1701 = vpop.f32.mrb[0].mxu0
        %v1702 = vadd.f32 0.0, %v1701
        %v1703 = vpop.f32.mrb[0].mxu0
        %v1704 = vadd.f32 0.0, %v1703
        %1705 = vdwg.mxu0
        %1706 = vmatprep.subr.mxu0 %v398
        %1707 = vmatpush1.msra.mxu0 %v397
        %1708 = vmatprep.subr.mxu0 %v402
        %1709 = vmatpush1.msra.mxu0 %v401
        %1710 = vmatprep.subr.mxu0 %v406
        %1711 = vmatpush1.msra.mxu0 %v405
        %1712 = vmatprep.subr.mxu0 %v410
        %1713 = vmatpush1.msra.mxu0 %v409
        %1714 = vmatprep.subr.mxu0 %v414
        %1715 = vmatpush1.msra.mxu0 %v413
        %1716 = vmatprep.subr.mxu0 %v418
        %1717 = vmatpush1.msra.mxu0 %v417
        %1718 = vmatprep.subr.mxu0 %v422
        %1719 = vmatpush1.msra.mxu0 %v421
        %1720 = vmatprep.subr.mxu0 %v426
        %1721 = vmatpush1.msra.mxu0 %v425
        %1722 = vmatprep.subr.mxu0 %v430
        %1723 = vmatpush1.msra.mxu0 %v429
        %1724 = vmatprep.subr.mxu0 %v434
        %1725 = vmatpush1.msra.mxu0 %v433
        %1726 = vmatprep.subr.mxu0 %v438
        %1727 = vmatpush1.msra.mxu0 %v437
        %1728 = vmatprep.subr.mxu0 %v442
        %1729 = vmatpush1.msra.mxu0 %v441
        %1730 = vmatprep.subr.mxu0 %v446
        %1731 = vmatpush1.msra.mxu0 %v445
        %1732 = vmatprep.subr.mxu0 %v450
        %1733 = vmatpush1.msra.mxu0 %v449
        %1734 = vmatprep.subr.mxu0 %v454
        %1735 = vmatpush1.msra.mxu0 %v453
        %1736 = vmatprep.subr.mxu0 %v458
        %1737 = vmatpush1.msra.mxu0 %v457
        %1738 = vmatprep.subr.mxu0 0.0
        %1739 = vmatpush1.msra.mxu0 0.0
        %1740 = vmatprep.subr.mxu0 0.0
        %1741 = vmatpush1.msra.mxu0 0.0
        %1742 = vmatprep.subr.mxu0 0.0
        %1743 = vmatpush1.msra.mxu0 0.0
        %1744 = vmatprep.subr.mxu0 0.0
        %1745 = vmatpush1.msra.mxu0 0.0
        %1746 = vmatprep.subr.mxu0 0.0
        %1747 = vmatpush1.msra.mxu0 0.0
        %1748 = vmatprep.subr.mxu0 0.0
        %1749 = vmatpush1.msra.mxu0 0.0
        %1750 = vmatprep.subr.mxu0 0.0
        %1751 = vmatpush1.msra.mxu0 0.0
        %1752 = vmatprep.subr.mxu0 0.0
        %1753 = vmatpush1.msra.mxu0 0.0
        %1754 = vmatprep.subr.mxu0 0.0
        %1755 = vmatpush1.msra.mxu0 0.0
        %1756 = vmatprep.subr.mxu0 0.0
        %1757 = vmatpush1.msra.mxu0 0.0
        %1758 = vmatprep.subr.mxu0 0.0
        %1759 = vmatpush1.msra.mxu0 0.0
        %1760 = vmatprep.subr.mxu0 0.0
        %1761 = vmatpush1.msra.mxu0 0.0
        %1762 = vmatprep.subr.mxu0 0.0
        %1763 = vmatpush1.msra.mxu0 0.0
        %1764 = vmatprep.subr.mxu0 0.0
        %1765 = vmatpush1.msra.mxu0 0.0
        %1766 = vmatprep.subr.mxu0 0.0
        %1767 = vmatpush1.msra.mxu0 0.0
        %1768 = vmatprep.subr.mxu0 0.0
        %1769 = vmatpush1.msra.mxu0 0.0
        %1770 = vmatprep.mubr.f32.mxu0 0.0
        %1771 = vmatmul.mubr.f32.gmra.mrb[0].mxu0 %v1627
        %v1772 = vpop.f32.mrb[0].mxu0
        %v1773 = vadd.f32 0.0, %v1772
        %v1774 = vpop.f32.mrb[0].mxu0
        %v1775 = vadd.f32 0.0, %v1774
        %1776 = vdwg.mxu0
        %v1777 = vadd.f32 %v1631, %v1702
        %v1778 = vadd.f32 %v1632, %v1704
        %v1779 = vadd.f32 %v1633, %v1773
        %v1780 = vadd.f32 %v1634, %v1775
        %v1781 = vxor.u32 %v1777, 2147483648
        %v1782 = vmul.f32 %v1781, 1.442695
        %v1783 = vpow.pop %v1782
        %v1784 = vadd.f32 %v1783, 1.0
        %v1785 = vrcp.pop %v1784
        %v1786 = vmul.f32 1.0, %v1785
        %v1787 = vxor.u32 %v1778, 2147483648
        %v1788 = vmul.f32 %v1787, 1.442695
        %v1789 = vpow.pop %v1788
        %v1790 = vadd.f32 %v1789, 1.0
        %v1791 = vrcp.pop %v1790
        %v1792 = vmul.f32 1.0, %v1791
        %v1793 = vtanh.pop %v1779
        %v1794 = vxor.u32 %v1780, 2147483648
        %v1795 = vmul.f32 %v1794, 1.442695
        %v1796 = vpow.pop %v1795
        %v1797 = vadd.f32 %v1796, 1.0
        %v1798 = vrcp.pop %v1797
        %v1799 = vmul.f32 1.0, %v1798
        %v1800 = vmul.f32 %v1792, %v1625
        %v1801 = vmul.f32 %v1786, %v1793
        %v1802 = vadd.f32 %v1800, %v1801
        %v1803 = vtanh.pop %v1802
        %v1804 = vmul.f32 %v1799, %v1803
        %s1805 = scalar_lea.vmem [#allocation2], 40
        %1806 = vst [vmem:[%s1805] sm:$0xff] %v1804
        %s1807 = scalar_lea.vmem [#allocation3], 192
        %v1808 = vld [vmem:[%s1807] sm:$0xff]
        %v1809 = vld [vmem:[%s1807 + $0x8] sm:$0xff]
        %v1810 = vld [vmem:[%s1807 + $0x10] sm:$0xff]
        %v1811 = vld [vmem:[%s1807 + $0x18] sm:$0xff]
        %1812 = vmatprep.subr.mxu0 %v396
        %1813 = vmatpush1.msra.mxu0 %v395
        %1814 = vmatprep.subr.mxu0 %v400
        %1815 = vmatpush1.msra.mxu0 %v399
        %1816 = vmatprep.subr.mxu0 %v404
        %1817 = vmatpush1.msra.mxu0 %v403
        %1818 = vmatprep.subr.mxu0 %v408
        %1819 = vmatpush1.msra.mxu0 %v407
        %1820 = vmatprep.subr.mxu0 %v412
        %1821 = vmatpush1.msra.mxu0 %v411
        %1822 = vmatprep.subr.mxu0 %v416
        %1823 = vmatpush1.msra.mxu0 %v415
        %1824 = vmatprep.subr.mxu0 %v420
        %1825 = vmatpush1.msra.mxu0 %v419
        %1826 = vmatprep.subr.mxu0 %v424
        %1827 = vmatpush1.msra.mxu0 %v423
        %1828 = vmatprep.subr.mxu0 %v428
        %1829 = vmatpush1.msra.mxu0 %v427
        %1830 = vmatprep.subr.mxu0 %v432
        %1831 = vmatpush1.msra.mxu0 %v431
        %1832 = vmatprep.subr.mxu0 %v436
        %1833 = vmatpush1.msra.mxu0 %v435
        %1834 = vmatprep.subr.mxu0 %v440
        %1835 = vmatpush1.msra.mxu0 %v439
        %1836 = vmatprep.subr.mxu0 %v444
        %1837 = vmatpush1.msra.mxu0 %v443
        %1838 = vmatprep.subr.mxu0 %v448
        %1839 = vmatpush1.msra.mxu0 %v447
        %1840 = vmatprep.subr.mxu0 %v452
        %1841 = vmatpush1.msra.mxu0 %v451
        %1842 = vmatprep.subr.mxu0 %v456
        %1843 = vmatpush1.msra.mxu0 %v455
        %1844 = vmatprep.subr.mxu0 0.0
        %1845 = vmatpush1.msra.mxu0 0.0
        %1846 = vmatprep.subr.mxu0 0.0
        %1847 = vmatpush1.msra.mxu0 0.0
        %1848 = vmatprep.subr.mxu0 0.0
        %1849 = vmatpush1.msra.mxu0 0.0
        %1850 = vmatprep.subr.mxu0 0.0
        %1851 = vmatpush1.msra.mxu0 0.0
        %1852 = vmatprep.subr.mxu0 0.0
        %1853 = vmatpush1.msra.mxu0 0.0
        %1854 = vmatprep.subr.mxu0 0.0
        %1855 = vmatpush1.msra.mxu0 0.0
        %1856 = vmatprep.subr.mxu0 0.0
        %1857 = vmatpush1.msra.mxu0 0.0
        %1858 = vmatprep.subr.mxu0 0.0
        %1859 = vmatpush1.msra.mxu0 0.0
        %1860 = vmatprep.subr.mxu0 0.0
        %1861 = vmatpush1.msra.mxu0 0.0
        %1862 = vmatprep.subr.mxu0 0.0
        %1863 = vmatpush1.msra.mxu0 0.0
        %1864 = vmatprep.subr.mxu0 0.0
        %1865 = vmatpush1.msra.mxu0 0.0
        %1866 = vmatprep.subr.mxu0 0.0
        %1867 = vmatpush1.msra.mxu0 0.0
        %1868 = vmatprep.subr.mxu0 0.0
        %1869 = vmatpush1.msra.mxu0 0.0
        %1870 = vmatprep.subr.mxu0 0.0
        %1871 = vmatpush1.msra.mxu0 0.0
        %1872 = vmatprep.subr.mxu0 0.0
        %1873 = vmatpush1.msra.mxu0 0.0
        %1874 = vmatprep.subr.mxu0 0.0
        %1875 = vmatpush1.msra.mxu0 0.0
        %1876 = vmatprep.mubr.f32.mxu0 0.0
        %1877 = vmatmul.mubr.f32.gmra.mrb[0].mxu0 %v1804
        %v1878 = vpop.f32.mrb[0].mxu0
        %v1879 = vadd.f32 0.0, %v1878
        %v1880 = vpop.f32.mrb[0].mxu0
        %v1881 = vadd.f32 0.0, %v1880
        %1882 = vdwg.mxu0
        %1883 = vmatprep.subr.mxu0 %v398
        %1884 = vmatpush1.msra.mxu0 %v397
        %1885 = vmatprep.subr.mxu0 %v402
        %1886 = vmatpush1.msra.mxu0 %v401
        %1887 = vmatprep.subr.mxu0 %v406
        %1888 = vmatpush1.msra.mxu0 %v405
        %1889 = vmatprep.subr.mxu0 %v410
        %1890 = vmatpush1.msra.mxu0 %v409
        %1891 = vmatprep.subr.mxu0 %v414
        %1892 = vmatpush1.msra.mxu0 %v413
        %1893 = vmatprep.subr.mxu0 %v418
        %1894 = vmatpush1.msra.mxu0 %v417
        %1895 = vmatprep.subr.mxu0 %v422
        %1896 = vmatpush1.msra.mxu0 %v421
        %1897 = vmatprep.subr.mxu0 %v426
        %1898 = vmatpush1.msra.mxu0 %v425
        %1899 = vmatprep.subr.mxu0 %v430
        %1900 = vmatpush1.msra.mxu0 %v429
        %1901 = vmatprep.subr.mxu0 %v434
        %1902 = vmatpush1.msra.mxu0 %v433
        %1903 = vmatprep.subr.mxu0 %v438
        %1904 = vmatpush1.msra.mxu0 %v437
        %1905 = vmatprep.subr.mxu0 %v442
        %1906 = vmatpush1.msra.mxu0 %v441
        %1907 = vmatprep.subr.mxu0 %v446
        %1908 = vmatpush1.msra.mxu0 %v445
        %1909 = vmatprep.subr.mxu0 %v450
        %1910 = vmatpush1.msra.mxu0 %v449
        %1911 = vmatprep.subr.mxu0 %v454
        %1912 = vmatpush1.msra.mxu0 %v453
        %1913 = vmatprep.subr.mxu0 %v458
        %1914 = vmatpush1.msra.mxu0 %v457
        %1915 = vmatprep.subr.mxu0 0.0
        %1916 = vmatpush1.msra.mxu0 0.0
        %1917 = vmatprep.subr.mxu0 0.0
        %1918 = vmatpush1.msra.mxu0 0.0
        %1919 = vmatprep.subr.mxu0 0.0
        %1920 = vmatpush1.msra.mxu0 0.0
        %1921 = vmatprep.subr.mxu0 0.0
        %1922 = vmatpush1.msra.mxu0 0.0
        %1923 = vmatprep.subr.mxu0 0.0
        %1924 = vmatpush1.msra.mxu0 0.0
        %1925 = vmatprep.subr.mxu0 0.0
        %1926 = vmatpush1.msra.mxu0 0.0
        %1927 = vmatprep.subr.mxu0 0.0
        %1928 = vmatpush1.msra.mxu0 0.0
        %1929 = vmatprep.subr.mxu0 0.0
        %1930 = vmatpush1.msra.mxu0 0.0
        %1931 = vmatprep.subr.mxu0 0.0
        %1932 = vmatpush1.msra.mxu0 0.0
        %1933 = vmatprep.subr.mxu0 0.0
        %1934 = vmatpush1.msra.mxu0 0.0
        %1935 = vmatprep.subr.mxu0 0.0
        %1936 = vmatpush1.msra.mxu0 0.0
        %1937 = vmatprep.subr.mxu0 0.0
        %1938 = vmatpush1.msra.mxu0 0.0
        %1939 = vmatprep.subr.mxu0 0.0
        %1940 = vmatpush1.msra.mxu0 0.0
        %1941 = vmatprep.subr.mxu0 0.0
        %1942 = vmatpush1.msra.mxu0 0.0
        %1943 = vmatprep.subr.mxu0 0.0
        %1944 = vmatpush1.msra.mxu0 0.0
        %1945 = vmatprep.subr.mxu0 0.0
        %1946 = vmatpush1.msra.mxu0 0.0
        %1947 = vmatprep.mubr.f32.mxu0 0.0
        %1948 = vmatmul.mubr.f32.gmra.mrb[0].mxu0 %v1804
        %v1949 = vpop.f32.mrb[0].mxu0
        %v1950 = vadd.f32 0.0, %v1949
        %v1951 = vpop.f32.mrb[0].mxu0
        %v1952 = vadd.f32 0.0, %v1951
        %1953 = vdwg.mxu0
        %v1954 = vadd.f32 %v1808, %v1879
        %v1955 = vadd.f32 %v1809, %v1881
        %v1956 = vadd.f32 %v1810, %v1950
        %v1957 = vadd.f32 %v1811, %v1952
        %v1958 = vxor.u32 %v1954, 2147483648
        %v1959 = vmul.f32 %v1958, 1.442695
        %v1960 = vpow.pop %v1959
        %v1961 = vadd.f32 %v1960, 1.0
        %v1962 = vrcp.pop %v1961
        %v1963 = vmul.f32 1.0, %v1962
        %v1964 = vxor.u32 %v1955, 2147483648
        %v1965 = vmul.f32 %v1964, 1.442695
        %v1966 = vpow.pop %v1965
        %v1967 = vadd.f32 %v1966, 1.0
        %v1968 = vrcp.pop %v1967
        %v1969 = vmul.f32 1.0, %v1968
        %v1970 = vtanh.pop %v1956
        %v1971 = vxor.u32 %v1957, 2147483648
        %v1972 = vmul.f32 %v1971, 1.442695
        %v1973 = vpow.pop %v1972
        %v1974 = vadd.f32 %v1973, 1.0
        %v1975 = vrcp.pop %v1974
        %v1976 = vmul.f32 1.0, %v1975
        %v1977 = vmul.f32 %v1969, %v1802
        %v1978 = vmul.f32 %v1963, %v1970
        %v1979 = vadd.f32 %v1977, %v1978
        %v1980 = vtanh.pop %v1979
        %v1981 = vmul.f32 %v1976, %v1980
        %s1982 = scalar_lea.vmem [#allocation2], 48
        %1983 = vst [vmem:[%s1982] sm:$0xff] %v1981
        %s1984 = scalar_lea.vmem [#allocation3], 224
        %v1985 = vld [vmem:[%s1984] sm:$0xff]
        %v1986 = vld [vmem:[%s1984 + $0x8] sm:$0xff]
        %v1987 = vld [vmem:[%s1984 + $0x10] sm:$0xff]
        %v1988 = vld [vmem:[%s1984 + $0x18] sm:$0xff]
        %1989 = vmatprep.subr.mxu0 %v396
        %1990 = vmatpush1.msra.mxu0 %v395
        %1991 = vmatprep.subr.mxu0 %v400
        %1992 = vmatpush1.msra.mxu0 %v399
        %1993 = vmatprep.subr.mxu0 %v404
        %1994 = vmatpush1.msra.mxu0 %v403
        %1995 = vmatprep.subr.mxu0 %v408
        %1996 = vmatpush1.msra.mxu0 %v407
        %1997 = vmatprep.subr.mxu0 %v412
        %1998 = vmatpush1.msra.mxu0 %v411
        %1999 = vmatprep.subr.mxu0 %v416
        %2000 = vmatpush1.msra.mxu0 %v415
        %2001 = vmatprep.subr.mxu0 %v420
        %2002 = vmatpush1.msra.mxu0 %v419
        %2003 = vmatprep.subr.mxu0 %v424
        %2004 = vmatpush1.msra.mxu0 %v423
        %2005 = vmatprep.subr.mxu0 %v428
        %2006 = vmatpush1.msra.mxu0 %v427
        %2007 = vmatprep.subr.mxu0 %v432
        %2008 = vmatpush1.msra.mxu0 %v431
        %2009 = vmatprep.subr.mxu0 %v436
        %2010 = vmatpush1.msra.mxu0 %v435
        %2011 = vmatprep.subr.mxu0 %v440
        %2012 = vmatpush1.msra.mxu0 %v439
        %2013 = vmatprep.subr.mxu0 %v444
        %2014 = vmatpush1.msra.mxu0 %v443
        %2015 = vmatprep.subr.mxu0 %v448
        %2016 = vmatpush1.msra.mxu0 %v447
        %2017 = vmatprep.subr.mxu0 %v452
        %2018 = vmatpush1.msra.mxu0 %v451
        %2019 = vmatprep.subr.mxu0 %v456
        %2020 = vmatpush1.msra.mxu0 %v455
        %2021 = vmatprep.subr.mxu0 0.0
        %2022 = vmatpush1.msra.mxu0 0.0
        %2023 = vmatprep.subr.mxu0 0.0
        %2024 = vmatpush1.msra.mxu0 0.0
        %2025 = vmatprep.subr.mxu0 0.0
        %2026 = vmatpush1.msra.mxu0 0.0
        %2027 = vmatprep.subr.mxu0 0.0
        %2028 = vmatpush1.msra.mxu0 0.0
        %2029 = vmatprep.subr.mxu0 0.0
        %2030 = vmatpush1.msra.mxu0 0.0
        %2031 = vmatprep.subr.mxu0 0.0
        %2032 = vmatpush1.msra.mxu0 0.0
        %2033 = vmatprep.subr.mxu0 0.0
        %2034 = vmatpush1.msra.mxu0 0.0
        %2035 = vmatprep.subr.mxu0 0.0
        %2036 = vmatpush1.msra.mxu0 0.0
        %2037 = vmatprep.subr.mxu0 0.0
        %2038 = vmatpush1.msra.mxu0 0.0
        %2039 = vmatprep.subr.mxu0 0.0
        %2040 = vmatpush1.msra.mxu0 0.0
        %2041 = vmatprep.subr.mxu0 0.0
        %2042 = vmatpush1.msra.mxu0 0.0
        %2043 = vmatprep.subr.mxu0 0.0
        %2044 = vmatpush1.msra.mxu0 0.0
        %2045 = vmatprep.subr.mxu0 0.0
        %2046 = vmatpush1.msra.mxu0 0.0
        %2047 = vmatprep.subr.mxu0 0.0
        %2048 = vmatpush1.msra.mxu0 0.0
        %2049 = vmatprep.subr.mxu0 0.0
        %2050 = vmatpush1.msra.mxu0 0.0
        %2051 = vmatprep.subr.mxu0 0.0
        %2052 = vmatpush1.msra.mxu0 0.0
        %2053 = vmatprep.mubr.f32.mxu0 0.0
        %2054 = vmatmul.mubr.f32.gmra.mrb[0].mxu0 %v1981
        %v2055 = vpop.f32.mrb[0].mxu0
        %v2056 = vadd.f32 0.0, %v2055
        %v2057 = vpop.f32.mrb[0].mxu0
        %v2058 = vadd.f32 0.0, %v2057
        %2059 = vdwg.mxu0
        %2060 = vmatprep.subr.mxu0 %v398
        %2061 = vmatpush1.msra.mxu0 %v397
        %2062 = vmatprep.subr.mxu0 %v402
        %2063 = vmatpush1.msra.mxu0 %v401
        %2064 = vmatprep.subr.mxu0 %v406
        %2065 = vmatpush1.msra.mxu0 %v405
        %2066 = vmatprep.subr.mxu0 %v410
        %2067 = vmatpush1.msra.mxu0 %v409
        %2068 = vmatprep.subr.mxu0 %v414
        %2069 = vmatpush1.msra.mxu0 %v413
        %2070 = vmatprep.subr.mxu0 %v418
        %2071 = vmatpush1.msra.mxu0 %v417
        %2072 = vmatprep.subr.mxu0 %v422
        %2073 = vmatpush1.msra.mxu0 %v421
        %2074 = vmatprep.subr.mxu0 %v426
        %2075 = vmatpush1.msra.mxu0 %v425
        %2076 = vmatprep.subr.mxu0 %v430
        %2077 = vmatpush1.msra.mxu0 %v429
        %2078 = vmatprep.subr.mxu0 %v434
        %2079 = vmatpush1.msra.mxu0 %v433
        %2080 = vmatprep.subr.mxu0 %v438
        %2081 = vmatpush1.msra.mxu0 %v437
        %2082 = vmatprep.subr.mxu0 %v442
        %2083 = vmatpush1.msra.mxu0 %v441
        %2084 = vmatprep.subr.mxu0 %v446
        %2085 = vmatpush1.msra.mxu0 %v445
        %2086 = vmatprep.subr.mxu0 %v450
        %2087 = vmatpush1.msra.mxu0 %v449
        %2088 = vmatprep.subr.mxu0 %v454
        %2089 = vmatpush1.msra.mxu0 %v453
        %2090 = vmatprep.subr.mxu0 %v458
        %2091 = vmatpush1.msra.mxu0 %v457
        %2092 = vmatprep.subr.mxu0 0.0
        %2093 = vmatpush1.msra.mxu0 0.0
        %2094 = vmatprep.subr.mxu0 0.0
        %2095 = vmatpush1.msra.mxu0 0.0
        %2096 = vmatprep.subr.mxu0 0.0
        %2097 = vmatpush1.msra.mxu0 0.0
        %2098 = vmatprep.subr.mxu0 0.0
        %2099 = vmatpush1.msra.mxu0 0.0
        %2100 = vmatprep.subr.mxu0 0.0
        %2101 = vmatpush1.msra.mxu0 0.0
        %2102 = vmatprep.subr.mxu0 0.0
        %2103 = vmatpush1.msra.mxu0 0.0
        %2104 = vmatprep.subr.mxu0 0.0
        %2105 = vmatpush1.msra.mxu0 0.0
        %2106 = vmatprep.subr.mxu0 0.0
        %2107 = vmatpush1.msra.mxu0 0.0
        %2108 = vmatprep.subr.mxu0 0.0
        %2109 = vmatpush1.msra.mxu0 0.0
        %2110 = vmatprep.subr.mxu0 0.0
        %2111 = vmatpush1.msra.mxu0 0.0
        %2112 = vmatprep.subr.mxu0 0.0
        %2113 = vmatpush1.msra.mxu0 0.0
        %2114 = vmatprep.subr.mxu0 0.0
        %2115 = vmatpush1.msra.mxu0 0.0
        %2116 = vmatprep.subr.mxu0 0.0
        %2117 = vmatpush1.msra.mxu0 0.0
        %2118 = vmatprep.subr.mxu0 0.0
        %2119 = vmatpush1.msra.mxu0 0.0
        %2120 = vmatprep.subr.mxu0 0.0
        %2121 = vmatpush1.msra.mxu0 0.0
        %2122 = vmatprep.subr.mxu0 0.0
        %2123 = vmatpush1.msra.mxu0 0.0
        %2124 = vmatprep.mubr.f32.mxu0 0.0
        %2125 = vmatmul.mubr.f32.gmra.mrb[0].mxu0 %v1981
        %v2126 = vpop.f32.mrb[0].mxu0
        %v2127 = vadd.f32 0.0, %v2126
        %v2128 = vpop.f32.mrb[0].mxu0
        %v2129 = vadd.f32 0.0, %v2128
        %2130 = vdwg.mxu0
        %v2131 = vadd.f32 %v1985, %v2056
        %v2132 = vadd.f32 %v1986, %v2058
        %v2133 = vadd.f32 %v1987, %v2127
        %v2134 = vadd.f32 %v1988, %v2129
        %v2135 = vxor.u32 %v2131, 2147483648
        %v2136 = vmul.f32 %v2135, 1.442695
        %v2137 = vpow.pop %v2136
        %v2138 = vadd.f32 %v2137, 1.0
        %v2139 = vrcp.pop %v2138
        %v2140 = vmul.f32 1.0, %v2139
        %v2141 = vxor.u32 %v2132, 2147483648
        %v2142 = vmul.f32 %v2141, 1.442695
        %v2143 = vpow.pop %v2142
        %v2144 = vadd.f32 %v2143, 1.0
        %v2145 = vrcp.pop %v2144
        %v2146 = vmul.f32 1.0, %v2145
        %v2147 = vtanh.pop %v2133
        %v2148 = vxor.u32 %v2134, 2147483648
        %v2149 = vmul.f32 %v2148, 1.442695
        %v2150 = vpow.pop %v2149
        %v2151 = vadd.f32 %v2150, 1.0
        %v2152 = vrcp.pop %v2151
        %v2153 = vmul.f32 1.0, %v2152
        %v2154 = vmul.f32 %v2146, %v1979
        %v2155 = vmul.f32 %v2140, %v2147
        %v2156 = vadd.f32 %v2154, %v2155
        %v2157 = vtanh.pop %v2156
        %v2158 = vmul.f32 %v2153, %v2157
        %s2159 = scalar_lea.vmem [#allocation2], 56
        %2160 = vst [vmem:[%s2159] sm:$0xff] %v2158
        %2161 = vst [vmem:[%s306] sm:$0xff] %v2158
        %2162 = vst [vmem:[%s310] sm:$0xff] %v2156
        %p2163 = scmp.lt.s32.totalorder %s23, 1
        %s2164 = scalar_select %p2163, %s23, 1
        %s2165 = smul.addr %s2164, 8
        %s2166 = scalar_lea.vmem %s4, %s2165
        %p2167 = scmp.lt.s32.totalorder %s23, 1
        %s2168 = scalar_select %p2167, %s23, 1
        %s2169 = smul.addr %s2168, 8
        %s2170 = scalar_lea.vmem %s5, %s2169
        // Predicated region
        $region49: #{encoder_forward.1} parent=35 // pred_check
          %p2171 = pneg %p140
        $region50: #{encoder_forward.1} parent=35 // pred_check_branch
          %2173 = sbr.rel (%p2171) target = $region52
        $region51: #{encoder_forward.1} parent=35 // pred_region
          _
        $region52: #{encoder_forward.1} parent=35 // pred_fallthru
          _
        // Predicated region
        $region53: #{encoder_forward.1} parent=35 // pred_check
          %p2174 = pneg %p166
        $region54: #{encoder_forward.1} parent=35 // pred_check_branch
          %2176 = sbr.rel (%p2174) target = $region56
        $region55: #{encoder_forward.1} parent=35 // pred_region
          _
        $region56: #{encoder_forward.1} parent=35 // pred_fallthru
          _
      $region36: #{encoder_forward.1} parent=5 // pred_fallthru
        _
      %p2177 = scmp.le.s32.totalorder 2, %s18
      // Predicated region
      $region57: #{encoder_forward.1} parent=5 // pred_check
        %p2178 = pneg %p2177
      $region58: #{encoder_forward.1} parent=5 // pred_check_branch
        %2180 = sbr.rel (%p2178) target = $region60
      $region59: #{encoder_forward.1} parent=5 // pred_region
        %s2181 = ssub.s32 %s18, 2
        // Predicated region
        $region61: #{encoder_forward.1} parent=59 // pred_check
          %p2182 = pneg %p146
        $region62: #{encoder_forward.1} parent=59 // pred_check_branch
          %2184 = sbr.rel (%p2182) target = $region64
        $region63: #{encoder_forward.1} parent=59 // pred_region
          %p2185 = scmp.lt.s32.totalorder %s24, 1
          %s2186 = scalar_select %p2185, %s24, 1
          %s2187 = smul.addr %s2186, 8
          %s2188 = scalar_lea.vmem %s4, %s2187
        $region64: #{encoder_forward.1} parent=59 // pred_fallthru
          _
        // Predicated region
        $region65: #{encoder_forward.1} parent=59 // pred_check
          %p2189 = pneg %p172
        $region66: #{encoder_forward.1} parent=59 // pred_check_branch
          %2191 = sbr.rel (%p2189) target = $region68
        $region67: #{encoder_forward.1} parent=59 // pred_region
          %p2192 = scmp.lt.s32.totalorder %s24, 1
          %s2193 = scalar_select %p2192, %s24, 1
          %s2194 = smul.addr %s2193, 8
          %s2195 = scalar_lea.vmem %s5, %s2194
        $region68: #{encoder_forward.1} parent=59 // pred_fallthru
          _
      $region60: #{encoder_forward.1} parent=5 // pred_fallthru
        _
    $region6: #{encoder_forward.1} parent=1 // loop_footer
      %s22 = sadd.s32 1, %s18
    $region7: #{encoder_forward.1} parent=1 // loop_footer_branch
      %17 = sbr.rel target = $region3
    $region8: #{encoder_forward.1} parent=1 // loop_exit
      _
    %2196 = vsyncpa [#allocation5], 1
    %s2197 = scalar_lea.sflag [#allocation5], 1
    %2198 = vsyncpa %s2197, 1
    %2199 = vsyncpa [#allocation7], 1
    %s2200 = scalar_lea.sflag [#allocation7], 1
    %2201 = vsyncpa %s2200, 1

</llo_original>
